<compile_context>
chip_gen: v6e
topology: v6e:2x2x1
jax: 0.10.0
libtpu: 0.0.40
codegen_flags: <defaults>
</compile_context>

<pallas_src>
import jax
import jax.numpy as jnp
from jax.experimental import pallas as pl
from jax.experimental.pallas import tpu as pltpu


def _round_up(x, m):
    return (x + m - 1) // m * m


# ----------------------------------------------------------------------------
# Fused kernel: embedding-gather + both LSTMs + final-state latch + MLP head.
# ----------------------------------------------------------------------------
def _fused_kernel(tokseq_ref, tokpep_ref,          # VMEM (N,1)   int32 (pep ids pre-offset by V1)
                  table_ref,                       # VMEM (Vp,8H) bf16  fused emb@W_ih + b table
                  lanelen_ref,                     # VMEM (Bp,2H) int32 per-lane target length
                  whh_ref,                         # VMEM (2H,8H) bf16  block-diag recurrent weights
                  w1_ref, b1_ref, w2_ref, b2_ref,  # head weights (f32)
                  out_ref,                         # VMEM (Bp,tag) f32
                  gx_ref):                         # VMEM scratch (N,8H) f32
    N, _ = gx_ref.shape
    Vp = table_ref.shape[0]
    G = whh_ref.shape[0]          # 2H: combined [seq|pep] state width
    Bp = out_ref.shape[0]
    T = N // Bp                   # static number of (padded) timesteps

    # --- embedding + input projection, hoisted off the serial path ---------
    # gx[t*Bp+b] = [x_seq @ W_ih_seq + b_seq | x_pep @ W_ih_pep + b_pep],
    # gathered for all timesteps at once with a single "two-hot" matmul
    # (bf16 operands, f32 accumulation; selection itself is exact).
    # TODO(synk): for large T*Bp, tile this gather + gx over time (or store gx
    # in bf16) to stay inside v7x's 64 MiB VMEM.
    iota_v = jax.lax.broadcasted_iota(jnp.int32, (N, Vp), 1)
    two_hot = (iota_v == tokseq_ref[...]) | (iota_v == tokpep_ref[...])
    gx_ref[...] = jnp.dot(two_hot.astype(jnp.bfloat16), table_ref[...],
                          preferred_element_type=jnp.float32)          # (N, 8H)

    whh = whh_ref[...]                 # bf16 (2H, 8H)
    lane_len = lanelen_ref[...]        # (Bp, 2H) int32
    zeros = jnp.zeros((Bp, G), jnp.float32)

    # TODO(synk): hold W_hh resident in the MXU across steps via
    # pltpu.matmul_push_rhs / matmul_acc_lhs / matmul_pop (review item); kept
    # jnp.dot for portability/compile safety since the (2H,8H) RHS would need
    # per-generation padding/splitting to the MXU tile shapes.

    # --- shared time loop: ONE bf16 MXU matmul per step drives both LSTM
    #     recurrences (block-diagonal W_hh, gate-interleaved columns) --------
    def step(t, carry):
        h, c, last = carry                                   # each (Bp, 2H) f32
        row = t * Bp
        if not isinstance(row, int):                         # dynamic fallback
            row = pl.multiple_of(row, Bp)
        gates = gx_ref[pl.ds(row, Bp), :] + jnp.dot(
            h.astype(jnp.bfloat16), whh,
            preferred_element_type=jnp.float32)              # (Bp, 8H) f32
        # gate layout: [ i | f | g | o ], each chunk G lanes = [seq(H)|pep(H)]
        sif = jax.nn.sigmoid(gates[:, 0:2 * G])              # i|f  (one push)
        g = jnp.tanh(gates[:, 2 * G:3 * G])                  # g only (narrowed)
        o = jax.nn.sigmoid(gates[:, 3 * G:4 * G])            # o only
        c = sif[:, G:2 * G] * c + sif[:, 0:G] * g
        h = o * jnp.tanh(c)
        # latch h at t == length-1 (per batch row, per LSTM half)
        last = jnp.where(lane_len == t + 1, h, last)
        return h, c, last

    carry = (zeros, zeros, zeros)
    if T <= 64:
        # Fully unrolled: static gx slices, latch compares against constants,
        # LLO scheduler sees across-step overlap.  Dead padded steps after the
        # latch are harmless (latched value never changes again).
        for t in range(T):
            carry = step(t, carry)
    else:
        # TODO(synk): for long sequences, reinstate a max-length scalar
        # prefetch to skip dead padded timesteps entirely.
        carry = jax.lax.fori_loop(0, T, step, carry, unroll=2)
    _, _, last = carry

    # --- classifier head: Linear -> LeakyReLU(0.01) -> Linear -> sigmoid ---
    l1 = jnp.dot(last, w1_ref[...],
                 preferred_element_type=jnp.float32) + b1_ref[...]
    l1 = jnp.where(l1 > 0, l1, 0.01 * l1)
    score = jnp.dot(l1, w2_ref[...],
                    preferred_element_type=jnp.float32) + b2_ref[...]
    out_ref[...] = jax.nn.sigmoid(score)


def _fused_call(tok_seq, tok_pep, table, lane_len, whh, w1, b1, w2, b2):
    N = tok_seq.shape[0]
    Vp, G4 = table.shape
    Bp, G = lane_len.shape
    H2 = w1.shape[1]
    tag = w2.shape[1]

    def full(shape):
        return pl.BlockSpec(shape, lambda i: (0,) * len(shape))

    return pl.pallas_call(
        _fused_kernel,
        out_shape=jax.ShapeDtypeStruct((Bp, tag), jnp.float32),
        grid_spec=pltpu.PrefetchScalarGridSpec(
            num_scalar_prefetch=0,
            grid=(1,),
            in_specs=[
                full((N, 1)), full((N, 1)),          # token ids
                full((Vp, G4)),                      # fused input-proj table (bf16)
                full((Bp, G)),                       # per-lane lengths
                full((G, G4)),                       # block-diag W_hh (bf16)
                full((G, H2)), full((1, H2)),        # hidden1
                full((H2, tag)), full((1, tag)),     # hidden2tag
            ],
            out_specs=full((Bp, tag)),
            scratch_shapes=[pltpu.VMEM((N, G4), jnp.float32)],
        ),
        compiler_params=pltpu.CompilerParams(
            dimension_semantics=("arbitrary",),
            vmem_limit_bytes=32 * 1024 * 1024),
    )(tok_seq, tok_pep, table, lane_len, whh, w1, b1, w2, b2)


# ----------------------------------------------------------------------------
# Parameters (PyTorch-equivalent shapes, stored transposed: x @ W).
# ----------------------------------------------------------------------------
def make_params(key, embedding_dim, hidden_dim, vocab_size, tagset_size,
                vocab_size2):
    E, H = embedding_dim, hidden_dim
    ks = jax.random.split(key, 12)
    bound = 1.0 / jnp.sqrt(jnp.float32(H))

    def u(k, shape, b):
        return jax.random.uniform(k, shape, jnp.float32, -b, b)

    emb1 = jax.random.normal(ks[0], (vocab_size, E), jnp.float32)
    emb1 = emb1.at[0].set(0.0)                               # padding_idx=0
    emb2 = jax.random.normal(ks[1], (vocab_size2, E), jnp.float32)
    emb2 = emb2.at[0].set(0.0)

    return {
        "emb_seq": emb1,
        "emb_pep": emb2,
        # LSTM for sequences (columns in PyTorch gate order i,f,g,o)
        "seq_w_ih": u(ks[2], (E, 4 * H), bound),
        "seq_w_hh": u(ks[3], (H, 4 * H), bound),
        "seq_b": u(ks[4], (1, 4 * H), bound) + u(ks[5], (1, 4 * H), bound),
        # LSTM for peptides
        "pep_w_ih": u(ks[6], (E, 4 * H), bound),
        "pep_w_hh": u(ks[7], (H, 4 * H), bound),
        "pep_b": u(ks[8], (1, 4 * H), bound) + u(ks[9], (1, 4 * H), bound),
        # hidden1: Linear(2H, H//2), hidden2tag: Linear(H//2, tagset_size)
        "w1": u(ks[10], (2 * H, H // 2), 1.0 / jnp.sqrt(jnp.float32(2 * H))),
        "b1": jnp.zeros((1, H // 2), jnp.float32),
        "w2": u(ks[11], (H // 2, tagset_size),
                1.0 / jnp.sqrt(jnp.float32(H // 2))),
        "b2": jnp.zeros((1, tagset_size), jnp.float32),
    }


def _scatter_gates(x_4h, H, half):
    """(R, 4H) in PyTorch gate order (i,f,g,o) -> (R, 8H) in the combined
    gate-interleaved layout [i_s i_p | f_s f_p | g_s g_p | o_s o_p], with x
    placed in the seq (half=0) or pep (half=1) slot and zeros elsewhere."""
    R = x_4h.shape[0]
    g = x_4h.reshape(R, 4, 1, H)
    z = jnp.zeros_like(g)
    parts = (g, z) if half == 0 else (z, g)
    return jnp.concatenate(parts, axis=2).reshape(R, 8 * H)


def fuse_params(params):
    """One-time precompute of the fused-kernel operands: per-vocab input
    projection tables (embedding folded into x @ W_ih + b) and the
    block-diagonal, gate-interleaved combined recurrent weights.  MXU
    operands are stored in bf16 (f32 accumulation inside the kernel)."""
    E, H4 = params["seq_w_ih"].shape
    H = H4 // 4
    V1 = params["emb_seq"].shape[0]
    V2 = params["emb_pep"].shape[0]

    gx_seq = params["emb_seq"] @ params["seq_w_ih"] + params["seq_b"]   # (V1,4H)
    gx_pep = params["emb_pep"] @ params["pep_w_ih"] + params["pep_b"]   # (V2,4H)
    table = jnp.concatenate([_scatter_gates(gx_seq, H, 0),
                             _scatter_gates(gx_pep, H, 1)], axis=0)
    Vp = _round_up(V1 + V2, 8)
    table = jnp.pad(table, ((0, Vp - (V1 + V2)), (0, 0)))

    whh = jnp.concatenate([_scatter_gates(params["seq_w_hh"], H, 0),
                           _scatter_gates(params["pep_w_hh"], H, 1)], axis=0)

    return {
        "table": table.astype(jnp.bfloat16),     # (Vp, 8H) bf16
        "whh": whh.astype(jnp.bfloat16),         # (2H, 8H) bf16 block-diagonal
        "w1": params["w1"], "b1": params["b1"],
        "w2": params["w2"], "b2": params["b2"],
        "v1": jnp.int32(V1),                     # row offset of the pep table
        "v2": jnp.int32(V2),
    }


# ----------------------------------------------------------------------------
# Forward pass (everything heavy happens inside the single Pallas kernel).
# ----------------------------------------------------------------------------
@jax.jit
def forward(fused, inputs, sequences_len, input_pep, peptides_len):
    """inputs: (T_seq, B) int32 token ids, input_pep: (T_pep, B) int32."""
    T_seq, B = inputs.shape
    T_pep, _ = input_pep.shape
    T_max = max(T_seq, T_pep)
    G4 = fused["table"].shape[1]                 # 8H
    G = G4 // 4                                  # 2H
    H = G // 2
    Bp = _round_up(B, 8)                         # pad batch to full sublanes
    N = T_max * Bp

    # Clamp ids so out-of-range seq ids can never read the pep table half.
    seq_ids = jnp.clip(inputs.astype(jnp.int32), 0, fused["v1"] - 1)
    pep_ids = jnp.clip(input_pep.astype(jnp.int32), 0, fused["v2"] - 1)

    seq_tok = jnp.zeros((T_max, Bp), jnp.int32).at[:T_seq, :B].set(seq_ids)
    pep_tok = jnp.zeros((T_max, Bp), jnp.int32).at[:T_pep, :B].set(pep_ids)
    tok_seq = seq_tok.reshape(N, 1)
    tok_pep = (pep_tok + fused["v1"]).reshape(N, 1)

    seq_len_p = jnp.zeros((Bp,), jnp.int32).at[:B].set(
        sequences_len.astype(jnp.int32))
    pep_len_p = jnp.zeros((Bp,), jnp.int32).at[:B].set(
        peptides_len.astype(jnp.int32))
    lane_len = jnp.concatenate(
        [jnp.broadcast_to(seq_len_p[:, None], (Bp, H)),
         jnp.broadcast_to(pep_len_p[:, None], (Bp, H))], axis=1)  # (Bp, 2H)

    out = _fused_call(tok_seq, tok_pep, fused["table"], lane_len,
                      fused["whh"], fused["w1"], fused["b1"],
                      fused["w2"], fused["b2"])
    return out[:B]


# ----------------------------------------------------------------------------
# Pure-JAX reference (mirrors the PyTorch module) for correctness checking.
# ----------------------------------------------------------------------------
def reference_forward(params, inputs, sequences_len, input_pep, peptides_len):
    def lstm_last(tok, lengths, emb, w_ih, w_hh, b):
        H = w_hh.shape[0]
        B = tok.shape[1]
        x = emb[tok]                                         # (T, B, E)

        def step(carry, xt):
            h, c = carry
            gates = xt @ w_ih + h @ w_hh + b
            i = jax.nn.sigmoid(gates[:, 0:H])
            f = jax.nn.sigmoid(gates[:, H:2 * H])
            g = jnp.tanh(gates[:, 2 * H:3 * H])
            o = jax.nn.sigmoid(gates[:, 3 * H:4 * H])
            c = f * c + i * g
            h = o * jnp.tanh(c)
            return (h, c), h

        init = (jnp.zeros((B, H), jnp.float32), jnp.zeros((B, H), jnp.float32))
        _, hs = jax.lax.scan(step, init, x)
        return hs[lengths - 1, jnp.arange(B)]

    seq_last = lstm_last(inputs, sequences_len, params["emb_seq"],
                         params["seq_w_ih"], params["seq_w_hh"], params["seq_b"])
    pep_last = lstm_last(input_pep, peptides_len, params["emb_pep"],
                         params["pep_w_ih"], params["pep_w_hh"], params["pep_b"])
    combined = jnp.concatenate([seq_last, pep_last], axis=1)
    l1 = combined @ params["w1"] + params["b1"]
    l1 = jnp.where(l1 > 0, l1, 0.01 * l1)
    return jax.nn.sigmoid(l1 @ params["w2"] + params["b2"])


if __name__ == "__main__":
    key = jax.random.PRNGKey(0)

    embedding_dim = 16
    hidden_dim = 32
    vocab_size = 21
    vocab_size2 = 26
    tagset_size = 3

    B = 4
    T_seq = 10
    T_pep = 8

    k1, k2, k3 = jax.random.split(key, 3)
    params = make_params(k1, embedding_dim, hidden_dim, vocab_size,
                         tagset_size, vocab_size2)

    # Lengths sorted decreasing (pack_padded_sequence enforce_sorted default).
    sequences_len = jnp.array([10, 8, 7, 5], dtype=jnp.int32)
    peptides_len = jnp.array([8, 7, 6, 4], dtype=jnp.int32)

    # Token ids (nonzero for valid positions, 0 = padding index).
    seq_tok = jax.random.randint(k2, (T_seq, B), 1, vocab_size, jnp.int32)
    pep_tok = jax.random.randint(k3, (T_pep, B), 1, vocab_size2, jnp.int32)
    t_seq = jnp.arange(T_seq)[:, None]
    t_pep = jnp.arange(T_pep)[:, None]
    inputs = jnp.where(t_seq < sequences_len[None, :], seq_tok, 0)
    input_pep = jnp.where(t_pep < peptides_len[None, :], pep_tok, 0)

    fused = fuse_params(params)        # one-time embedding/weight fusion
    out = forward(fused, inputs, sequences_len, input_pep, peptides_len)
    out = jax.block_until_ready(out)

    assert out.shape == (B, tagset_size)
    assert bool(jnp.all(jnp.isfinite(out)))

    ref = reference_forward(params, inputs, sequences_len, input_pep,
                            peptides_len)
    # Tolerance accounts for bf16 MXU operands (f32 accumulation) fed back
    # through up to T_max recurrence steps; outputs are sigmoid probabilities.
    max_diff = float(jnp.max(jnp.abs(out - ref)))
    assert max_diff < 2.5e-2, f"mismatch vs reference, max diff {max_diff}"

    print("KERNEL_OK")
</pallas_src>

<mosaic_0001>
module attributes {stable_mosaic.version = 11 : i64} {
  func.func @_fused_kernel(%arg0: i32, %arg1: memref<80x1xi32, #tpu.memory_space<vmem>>, %arg2: memref<80x1xi32, #tpu.memory_space<vmem>>, %arg3: memref<48x256xbf16, #tpu.memory_space<vmem>>, %arg4: memref<8x64xi32, #tpu.memory_space<vmem>>, %arg5: memref<64x256xbf16, #tpu.memory_space<vmem>>, %arg6: memref<64x16xf32, #tpu.memory_space<vmem>>, %arg7: memref<1x16xf32, #tpu.memory_space<vmem>>, %arg8: memref<16x3xf32, #tpu.memory_space<vmem>>, %arg9: memref<1x3xf32, #tpu.memory_space<vmem>>, %arg10: memref<8x3xf32, #tpu.memory_space<vmem>>, %arg11: memref<80x256xf32, #tpu.memory_space<vmem>>) attributes {dimension_semantics = [#tpu.dimension_semantics<arbitrary>], iteration_bounds = array<i64: 1>, scalar_prefetch = 0 : i64, scratch_operands = 1 : i64, tpu.core_type = #tpu.core_type<tc>, window_params = [{pipeline_mode = #tpu.pipeline_mode<synchronous>, transform_indices = @transform_0, window_bounds = array<i64: 80, 1>}, {pipeline_mode = #tpu.pipeline_mode<synchronous>, transform_indices = @transform_1, window_bounds = array<i64: 80, 1>}, {pipeline_mode = #tpu.pipeline_mode<synchronous>, transform_indices = @transform_2, window_bounds = array<i64: 48, 256>}, {pipeline_mode = #tpu.pipeline_mode<synchronous>, transform_indices = @transform_3, window_bounds = array<i64: 8, 64>}, {pipeline_mode = #tpu.pipeline_mode<synchronous>, transform_indices = @transform_4, window_bounds = array<i64: 64, 256>}, {pipeline_mode = #tpu.pipeline_mode<synchronous>, transform_indices = @transform_5, window_bounds = array<i64: 64, 16>}, {pipeline_mode = #tpu.pipeline_mode<synchronous>, transform_indices = @transform_6, window_bounds = array<i64: 1, 16>}, {pipeline_mode = #tpu.pipeline_mode<synchronous>, transform_indices = @transform_7, window_bounds = array<i64: 16, 3>}, {pipeline_mode = #tpu.pipeline_mode<synchronous>, transform_indices = @transform_8, window_bounds = array<i64: 1, 3>}, {pipeline_mode = #tpu.pipeline_mode<synchronous>, transform_indices = @transform_9, window_bounds = array<i64: 8, 3>}]} {
    %0 = tpu.iota {dimensions = array<i32: 1>} : vector<80x48xi32>
    %c0 = arith.constant 0 : index
    %c0_0 = arith.constant 0 : index
    %1 = vector.load %arg1[%c0, %c0_0] : memref<80x1xi32, #tpu.memory_space<vmem>>, vector<80x1xi32>
    %2 = vector.broadcast %1 : vector<80x1xi32> to vector<80x48xi32>
    %3 = arith.cmpi eq, %0, %2 : vector<80x48xi32>
    %c0_1 = arith.constant 0 : index
    %c0_2 = arith.constant 0 : index
    %4 = vector.load %arg2[%c0_1, %c0_2] : memref<80x1xi32, #tpu.memory_space<vmem>>, vector<80x1xi32>
    %5 = vector.broadcast %4 : vector<80x1xi32> to vector<80x48xi32>
    %6 = arith.cmpi eq, %0, %5 : vector<80x48xi32>
    %7 = arith.ori %3, %6 : vector<80x48xi1>
    %8 = arith.extui %7 : vector<80x48xi1> to vector<80x48xi32>
    %9 = arith.sitofp %8 : vector<80x48xi32> to vector<80x48xf32>
    %10 = arith.truncf %9 : vector<80x48xf32> to vector<80x48xbf16>
    %c0_3 = arith.constant 0 : index
    %c0_4 = arith.constant 0 : index
    %11 = vector.load %arg3[%c0_3, %c0_4] : memref<48x256xbf16, #tpu.memory_space<vmem>>, vector<48x256xbf16>
    %cst = arith.constant dense<0.000000e+00> : vector<80x256xf32>
    %12 = tpu.matmul %10, %11, %cst {dimension_numbers = #tpu.dot_dimension_numbers<[1], [0], [0], [1], [0, 0, 1, 1], [], []>} : vector<80x48xbf16>, vector<48x256xbf16>, vector<80x256xf32> -> vector<80x256xf32>
    %c0_5 = arith.constant 0 : index
    %c0_6 = arith.constant 0 : index
    %13 = vector.load %arg11[%c0_5, %c0_6] : memref<80x256xf32, #tpu.memory_space<vmem>>, vector<80x256xf32>
    tpu.vector_store %arg11[%c0_5, %c0_6], %12 {strides = array<i32>} : memref<80x256xf32, #tpu.memory_space<vmem>>, vector<80x256xf32>,
    %c0_7 = arith.constant 0 : index
    %c0_8 = arith.constant 0 : index
    %14 = vector.load %arg5[%c0_7, %c0_8] : memref<64x256xbf16, #tpu.memory_space<vmem>>, vector<64x256xbf16>
    %c0_9 = arith.constant 0 : index
    %c0_10 = arith.constant 0 : index
    %15 = vector.load %arg4[%c0_9, %c0_10] : memref<8x64xi32, #tpu.memory_space<vmem>>, vector<8x64xi32>
    %cst_11 = arith.constant 0.000000e+00 : f32
    %16 = vector.broadcast %cst_11 : f32 to vector<8x64xf32>
    %c0_12 = arith.constant 0 : index
    %c0_13 = arith.constant 0 : index
    %17 = vector.load %arg11[%c0_12, %c0_13] : memref<80x256xf32, #tpu.memory_space<vmem>>, vector<8x256xf32>
    %18 = arith.truncf %16 : vector<8x64xf32> to vector<8x64xbf16>
    %cst_14 = arith.constant dense<0.000000e+00> : vector<8x256xf32>
    %19 = tpu.matmul %18, %14, %cst_14 {dimension_numbers = #tpu.dot_dimension_numbers<[1], [0], [0], [1], [0, 0, 1, 1], [], []>} : vector<8x64xbf16>, vector<64x256xbf16>, vector<8x256xf32> -> vector<8x256xf32>
    %20 = arith.addf %17, %19 : vector<8x256xf32>
    %21 = vector.extract_strided_slice %20 {offsets = [0, 0], sizes = [8, 128], strides = [1, 1]} : vector<8x256xf32> to vector<8x128xf32>
    %22 = arith.negf %21 : vector<8x128xf32>
    %23 = math.exp %22 : vector<8x128xf32>
    %cst_15 = arith.constant 1.000000e+00 : f32
    %24 = vector.broadcast %cst_15 : f32 to vector<8x128xf32>
    %25 = arith.addf %24, %23 : vector<8x128xf32>
    %26 = arith.divf %24, %25 : vector<8x128xf32>
    %27 = vector.extract_strided_slice %20 {offsets = [0, 128], sizes = [8, 64], strides = [1, 1]} : vector<8x256xf32> to vector<8x64xf32>
    %28 = math.tanh %27 : vector<8x64xf32>
    %29 = vector.extract_strided_slice %20 {offsets = [0, 192], sizes = [8, 64], strides = [1, 1]} : vector<8x256xf32> to vector<8x64xf32>
    %30 = arith.negf %29 : vector<8x64xf32>
    %31 = math.exp %30 : vector<8x64xf32>
    %cst_16 = arith.constant 1.000000e+00 : f32
    %32 = vector.broadcast %cst_16 : f32 to vector<8x64xf32>
    %33 = arith.addf %32, %31 : vector<8x64xf32>
    %34 = arith.divf %32, %33 : vector<8x64xf32>
    %35 = vector.extract_strided_slice %26 {offsets = [0, 64], sizes = [8, 64], strides = [1, 1]} : vector<8x128xf32> to vector<8x64xf32>
    %36 = arith.mulf %35, %16 : vector<8x64xf32>
    %37 = vector.extract_strided_slice %26 {offsets = [0, 0], sizes = [8, 64], strides = [1, 1]} : vector<8x128xf32> to vector<8x64xf32>
    %38 = arith.mulf %37, %28 : vector<8x64xf32>
    %39 = arith.addf %36, %38 : vector<8x64xf32>
    %40 = math.tanh %39 : vector<8x64xf32>
    %41 = arith.mulf %34, %40 : vector<8x64xf32>
    %c1_i32 = arith.constant 1 : i32
    %42 = vector.broadcast %c1_i32 : i32 to vector<8x64xi32>
    %43 = arith.cmpi eq, %15, %42 : vector<8x64xi32>
    %44 = arith.select %43, %41, %16 : vector<8x64xi1>, vector<8x64xf32>
    %c8 = arith.constant 8 : index
    %c0_17 = arith.constant 0 : index
    %45 = vector.load %arg11[%c8, %c0_17] : memref<80x256xf32, #tpu.memory_space<vmem>>, vector<8x256xf32>
    %46 = arith.truncf %41 : vector<8x64xf32> to vector<8x64xbf16>
    %cst_18 = arith.constant dense<0.000000e+00> : vector<8x256xf32>
    %47 = tpu.matmul %46, %14, %cst_18 {dimension_numbers = #tpu.dot_dimension_numbers<[1], [0], [0], [1], [0, 0, 1, 1], [], []>} : vector<8x64xbf16>, vector<64x256xbf16>, vector<8x256xf32> -> vector<8x256xf32>
    %48 = arith.addf %45, %47 : vector<8x256xf32>
    %49 = vector.extract_strided_slice %48 {offsets = [0, 0], sizes = [8, 128], strides = [1, 1]} : vector<8x256xf32> to vector<8x128xf32>
    %50 = arith.negf %49 : vector<8x128xf32>
    %51 = math.exp %50 : vector<8x128xf32>
    %cst_19 = arith.constant 1.000000e+00 : f32
    %52 = vector.broadcast %cst_19 : f32 to vector<8x128xf32>
    %53 = arith.addf %52, %51 : vector<8x128xf32>
    %54 = arith.divf %52, %53 : vector<8x128xf32>
    %55 = vector.extract_strided_slice %48 {offsets = [0, 128], sizes = [8, 64], strides = [1, 1]} : vector<8x256xf32> to vector<8x64xf32>
    %56 = math.tanh %55 : vector<8x64xf32>
    %57 = vector.extract_strided_slice %48 {offsets = [0, 192], sizes = [8, 64], strides = [1, 1]} : vector<8x256xf32> to vector<8x64xf32>
    %58 = arith.negf %57 : vector<8x64xf32>
    %59 = math.exp %58 : vector<8x64xf32>
    %cst_20 = arith.constant 1.000000e+00 : f32
    %60 = vector.broadcast %cst_20 : f32 to vector<8x64xf32>
    %61 = arith.addf %60, %59 : vector<8x64xf32>
    %62 = arith.divf %60, %61 : vector<8x64xf32>
    %63 = vector.extract_strided_slice %54 {offsets = [0, 64], sizes = [8, 64], strides = [1, 1]} : vector<8x128xf32> to vector<8x64xf32>
    %64 = arith.mulf %63, %39 : vector<8x64xf32>
    %65 = vector.extract_strided_slice %54 {offsets = [0, 0], sizes = [8, 64], strides = [1, 1]} : vector<8x128xf32> to vector<8x64xf32>
    %66 = arith.mulf %65, %56 : vector<8x64xf32>
    %67 = arith.addf %64, %66 : vector<8x64xf32>
    %68 = math.tanh %67 : vector<8x64xf32>
    %69 = arith.mulf %62, %68 : vector<8x64xf32>
    %c2_i32 = arith.constant 2 : i32
    %70 = vector.broadcast %c2_i32 : i32 to vector<8x64xi32>
    %71 = arith.cmpi eq, %15, %70 : vector<8x64xi32>
    %72 = arith.select %71, %69, %44 : vector<8x64xi1>, vector<8x64xf32>
    %c16 = arith.constant 16 : index
    %c0_21 = arith.constant 0 : index
    %73 = vector.load %arg11[%c16, %c0_21] : memref<80x256xf32, #tpu.memory_space<vmem>>, vector<8x256xf32>
    %74 = arith.truncf %69 : vector<8x64xf32> to vector<8x64xbf16>
    %cst_22 = arith.constant dense<0.000000e+00> : vector<8x256xf32>
    %75 = tpu.matmul %74, %14, %cst_22 {dimension_numbers = #tpu.dot_dimension_numbers<[1], [0], [0], [1], [0, 0, 1, 1], [], []>} : vector<8x64xbf16>, vector<64x256xbf16>, vector<8x256xf32> -> vector<8x256xf32>
    %76 = arith.addf %73, %75 : vector<8x256xf32>
    %77 = vector.extract_strided_slice %76 {offsets = [0, 0], sizes = [8, 128], strides = [1, 1]} : vector<8x256xf32> to vector<8x128xf32>
    %78 = arith.negf %77 : vector<8x128xf32>
    %79 = math.exp %78 : vector<8x128xf32>
    %cst_23 = arith.constant 1.000000e+00 : f32
    %80 = vector.broadcast %cst_23 : f32 to vector<8x128xf32>
    %81 = arith.addf %80, %79 : vector<8x128xf32>
    %82 = arith.divf %80, %81 : vector<8x128xf32>
    %83 = vector.extract_strided_slice %76 {offsets = [0, 128], sizes = [8, 64], strides = [1, 1]} : vector<8x256xf32> to vector<8x64xf32>
    %84 = math.tanh %83 : vector<8x64xf32>
    %85 = vector.extract_strided_slice %76 {offsets = [0, 192], sizes = [8, 64], strides = [1, 1]} : vector<8x256xf32> to vector<8x64xf32>
    %86 = arith.negf %85 : vector<8x64xf32>
    %87 = math.exp %86 : vector<8x64xf32>
    %cst_24 = arith.constant 1.000000e+00 : f32
    %88 = vector.broadcast %cst_24 : f32 to vector<8x64xf32>
    %89 = arith.addf %88, %87 : vector<8x64xf32>
    %90 = arith.divf %88, %89 : vector<8x64xf32>
    %91 = vector.extract_strided_slice %82 {offsets = [0, 64], sizes = [8, 64], strides = [1, 1]} : vector<8x128xf32> to vector<8x64xf32>
    %92 = arith.mulf %91, %67 : vector<8x64xf32>
    %93 = vector.extract_strided_slice %82 {offsets = [0, 0], sizes = [8, 64], strides = [1, 1]} : vector<8x128xf32> to vector<8x64xf32>
    %94 = arith.mulf %93, %84 : vector<8x64xf32>
    %95 = arith.addf %92, %94 : vector<8x64xf32>
    %96 = math.tanh %95 : vector<8x64xf32>
    %97 = arith.mulf %90, %96 : vector<8x64xf32>
    %c3_i32 = arith.constant 3 : i32
    %98 = vector.broadcast %c3_i32 : i32 to vector<8x64xi32>
    %99 = arith.cmpi eq, %15, %98 : vector<8x64xi32>
    %100 = arith.select %99, %97, %72 : vector<8x64xi1>, vector<8x64xf32>
    %c24 = arith.constant 24 : index
    %c0_25 = arith.constant 0 : index
    %101 = vector.load %arg11[%c24, %c0_25] : memref<80x256xf32, #tpu.memory_space<vmem>>, vector<8x256xf32>
    %102 = arith.truncf %97 : vector<8x64xf32> to vector<8x64xbf16>
    %cst_26 = arith.constant dense<0.000000e+00> : vector<8x256xf32>
    %103 = tpu.matmul %102, %14, %cst_26 {dimension_numbers = #tpu.dot_dimension_numbers<[1], [0], [0], [1], [0, 0, 1, 1], [], []>} : vector<8x64xbf16>, vector<64x256xbf16>, vector<8x256xf32> -> vector<8x256xf32>
    %104 = arith.addf %101, %103 : vector<8x256xf32>
    %105 = vector.extract_strided_slice %104 {offsets = [0, 0], sizes = [8, 128], strides = [1, 1]} : vector<8x256xf32> to vector<8x128xf32>
    %106 = arith.negf %105 : vector<8x128xf32>
    %107 = math.exp %106 : vector<8x128xf32>
    %cst_27 = arith.constant 1.000000e+00 : f32
    %108 = vector.broadcast %cst_27 : f32 to vector<8x128xf32>
    %109 = arith.addf %108, %107 : vector<8x128xf32>
    %110 = arith.divf %108, %109 : vector<8x128xf32>
    %111 = vector.extract_strided_slice %104 {offsets = [0, 128], sizes = [8, 64], strides = [1, 1]} : vector<8x256xf32> to vector<8x64xf32>
    %112 = math.tanh %111 : vector<8x64xf32>
    %113 = vector.extract_strided_slice %104 {offsets = [0, 192], sizes = [8, 64], strides = [1, 1]} : vector<8x256xf32> to vector<8x64xf32>
    %114 = arith.negf %113 : vector<8x64xf32>
    %115 = math.exp %114 : vector<8x64xf32>
    %cst_28 = arith.constant 1.000000e+00 : f32
    %116 = vector.broadcast %cst_28 : f32 to vector<8x64xf32>
    %117 = arith.addf %116, %115 : vector<8x64xf32>
    %118 = arith.divf %116, %117 : vector<8x64xf32>
    %119 = vector.extract_strided_slice %110 {offsets = [0, 64], sizes = [8, 64], strides = [1, 1]} : vector<8x128xf32> to vector<8x64xf32>
    %120 = arith.mulf %119, %95 : vector<8x64xf32>
    %121 = vector.extract_strided_slice %110 {offsets = [0, 0], sizes = [8, 64], strides = [1, 1]} : vector<8x128xf32> to vector<8x64xf32>
    %122 = arith.mulf %121, %112 : vector<8x64xf32>
    %123 = arith.addf %120, %122 : vector<8x64xf32>
    %124 = math.tanh %123 : vector<8x64xf32>
    %125 = arith.mulf %118, %124 : vector<8x64xf32>
    %c4_i32 = arith.constant 4 : i32
    %126 = vector.broadcast %c4_i32 : i32 to vector<8x64xi32>
    %127 = arith.cmpi eq, %15, %126 : vector<8x64xi32>
    %128 = arith.select %127, %125, %100 : vector<8x64xi1>, vector<8x64xf32>
    %c32 = arith.constant 32 : index
    %c0_29 = arith.constant 0 : index
    %129 = vector.load %arg11[%c32, %c0_29] : memref<80x256xf32, #tpu.memory_space<vmem>>, vector<8x256xf32>
    %130 = arith.truncf %125 : vector<8x64xf32> to vector<8x64xbf16>
    %cst_30 = arith.constant dense<0.000000e+00> : vector<8x256xf32>
    %131 = tpu.matmul %130, %14, %cst_30 {dimension_numbers = #tpu.dot_dimension_numbers<[1], [0], [0], [1], [0, 0, 1, 1], [], []>} : vector<8x64xbf16>, vector<64x256xbf16>, vector<8x256xf32> -> vector<8x256xf32>
    %132 = arith.addf %129, %131 : vector<8x256xf32>
    %133 = vector.extract_strided_slice %132 {offsets = [0, 0], sizes = [8, 128], strides = [1, 1]} : vector<8x256xf32> to vector<8x128xf32>
    %134 = arith.negf %133 : vector<8x128xf32>
    %135 = math.exp %134 : vector<8x128xf32>
    %cst_31 = arith.constant 1.000000e+00 : f32
    %136 = vector.broadcast %cst_31 : f32 to vector<8x128xf32>
    %137 = arith.addf %136, %135 : vector<8x128xf32>
    %138 = arith.divf %136, %137 : vector<8x128xf32>
    %139 = vector.extract_strided_slice %132 {offsets = [0, 128], sizes = [8, 64], strides = [1, 1]} : vector<8x256xf32> to vector<8x64xf32>
    %140 = math.tanh %139 : vector<8x64xf32>
    %141 = vector.extract_strided_slice %132 {offsets = [0, 192], sizes = [8, 64], strides = [1, 1]} : vector<8x256xf32> to vector<8x64xf32>
    %142 = arith.negf %141 : vector<8x64xf32>
    %143 = math.exp %142 : vector<8x64xf32>
    %cst_32 = arith.constant 1.000000e+00 : f32
    %144 = vector.broadcast %cst_32 : f32 to vector<8x64xf32>
    %145 = arith.addf %144, %143 : vector<8x64xf32>
    %146 = arith.divf %144, %145 : vector<8x64xf32>
    %147 = vector.extract_strided_slice %138 {offsets = [0, 64], sizes = [8, 64], strides = [1, 1]} : vector<8x128xf32> to vector<8x64xf32>
    %148 = arith.mulf %147, %123 : vector<8x64xf32>
    %149 = vector.extract_strided_slice %138 {offsets = [0, 0], sizes = [8, 64], strides = [1, 1]} : vector<8x128xf32> to vector<8x64xf32>
    %150 = arith.mulf %149, %140 : vector<8x64xf32>
    %151 = arith.addf %148, %150 : vector<8x64xf32>
    %152 = math.tanh %151 : vector<8x64xf32>
    %153 = arith.mulf %146, %152 : vector<8x64xf32>
    %c5_i32 = arith.constant 5 : i32
    %154 = vector.broadcast %c5_i32 : i32 to vector<8x64xi32>
    %155 = arith.cmpi eq, %15, %154 : vector<8x64xi32>
    %156 = arith.select %155, %153, %128 : vector<8x64xi1>, vector<8x64xf32>
    %c40 = arith.constant 40 : index
    %c0_33 = arith.constant 0 : index
    %157 = vector.load %arg11[%c40, %c0_33] : memref<80x256xf32, #tpu.memory_space<vmem>>, vector<8x256xf32>
    %158 = arith.truncf %153 : vector<8x64xf32> to vector<8x64xbf16>
    %cst_34 = arith.constant dense<0.000000e+00> : vector<8x256xf32>
    %159 = tpu.matmul %158, %14, %cst_34 {dimension_numbers = #tpu.dot_dimension_numbers<[1], [0], [0], [1], [0, 0, 1, 1], [], []>} : vector<8x64xbf16>, vector<64x256xbf16>, vector<8x256xf32> -> vector<8x256xf32>
    %160 = arith.addf %157, %159 : vector<8x256xf32>
    %161 = vector.extract_strided_slice %160 {offsets = [0, 0], sizes = [8, 128], strides = [1, 1]} : vector<8x256xf32> to vector<8x128xf32>
    %162 = arith.negf %161 : vector<8x128xf32>
    %163 = math.exp %162 : vector<8x128xf32>
    %cst_35 = arith.constant 1.000000e+00 : f32
    %164 = vector.broadcast %cst_35 : f32 to vector<8x128xf32>
    %165 = arith.addf %164, %163 : vector<8x128xf32>
    %166 = arith.divf %164, %165 : vector<8x128xf32>
    %167 = vector.extract_strided_slice %160 {offsets = [0, 128], sizes = [8, 64], strides = [1, 1]} : vector<8x256xf32> to vector<8x64xf32>
    %168 = math.tanh %167 : vector<8x64xf32>
    %169 = vector.extract_strided_slice %160 {offsets = [0, 192], sizes = [8, 64], strides = [1, 1]} : vector<8x256xf32> to vector<8x64xf32>
    %170 = arith.negf %169 : vector<8x64xf32>
    %171 = math.exp %170 : vector<8x64xf32>
    %cst_36 = arith.constant 1.000000e+00 : f32
    %172 = vector.broadcast %cst_36 : f32 to vector<8x64xf32>
    %173 = arith.addf %172, %171 : vector<8x64xf32>
    %174 = arith.divf %172, %173 : vector<8x64xf32>
    %175 = vector.extract_strided_slice %166 {offsets = [0, 64], sizes = [8, 64], strides = [1, 1]} : vector<8x128xf32> to vector<8x64xf32>
    %176 = arith.mulf %175, %151 : vector<8x64xf32>
    %177 = vector.extract_strided_slice %166 {offsets = [0, 0], sizes = [8, 64], strides = [1, 1]} : vector<8x128xf32> to vector<8x64xf32>
    %178 = arith.mulf %177, %168 : vector<8x64xf32>
    %179 = arith.addf %176, %178 : vector<8x64xf32>
    %180 = math.tanh %179 : vector<8x64xf32>
    %181 = arith.mulf %174, %180 : vector<8x64xf32>
    %c6_i32 = arith.constant 6 : i32
    %182 = vector.broadcast %c6_i32 : i32 to vector<8x64xi32>
    %183 = arith.cmpi eq, %15, %182 : vector<8x64xi32>
    %184 = arith.select %183, %181, %156 : vector<8x64xi1>, vector<8x64xf32>
    %c48 = arith.constant 48 : index
    %c0_37 = arith.constant 0 : index
    %185 = vector.load %arg11[%c48, %c0_37] : memref<80x256xf32, #tpu.memory_space<vmem>>, vector<8x256xf32>
    %186 = arith.truncf %181 : vector<8x64xf32> to vector<8x64xbf16>
    %cst_38 = arith.constant dense<0.000000e+00> : vector<8x256xf32>
    %187 = tpu.matmul %186, %14, %cst_38 {dimension_numbers = #tpu.dot_dimension_numbers<[1], [0], [0], [1], [0, 0, 1, 1], [], []>} : vector<8x64xbf16>, vector<64x256xbf16>, vector<8x256xf32> -> vector<8x256xf32>
    %188 = arith.addf %185, %187 : vector<8x256xf32>
    %189 = vector.extract_strided_slice %188 {offsets = [0, 0], sizes = [8, 128], strides = [1, 1]} : vector<8x256xf32> to vector<8x128xf32>
    %190 = arith.negf %189 : vector<8x128xf32>
    %191 = math.exp %190 : vector<8x128xf32>
    %cst_39 = arith.constant 1.000000e+00 : f32
    %192 = vector.broadcast %cst_39 : f32 to vector<8x128xf32>
    %193 = arith.addf %192, %191 : vector<8x128xf32>
    %194 = arith.divf %192, %193 : vector<8x128xf32>
    %195 = vector.extract_strided_slice %188 {offsets = [0, 128], sizes = [8, 64], strides = [1, 1]} : vector<8x256xf32> to vector<8x64xf32>
    %196 = math.tanh %195 : vector<8x64xf32>
    %197 = vector.extract_strided_slice %188 {offsets = [0, 192], sizes = [8, 64], strides = [1, 1]} : vector<8x256xf32> to vector<8x64xf32>
    %198 = arith.negf %197 : vector<8x64xf32>
    %199 = math.exp %198 : vector<8x64xf32>
    %cst_40 = arith.constant 1.000000e+00 : f32
    %200 = vector.broadcast %cst_40 : f32 to vector<8x64xf32>
    %201 = arith.addf %200, %199 : vector<8x64xf32>
    %202 = arith.divf %200, %201 : vector<8x64xf32>
    %203 = vector.extract_strided_slice %194 {offsets = [0, 64], sizes = [8, 64], strides = [1, 1]} : vector<8x128xf32> to vector<8x64xf32>
    %204 = arith.mulf %203, %179 : vector<8x64xf32>
    %205 = vector.extract_strided_slice %194 {offsets = [0, 0], sizes = [8, 64], strides = [1, 1]} : vector<8x128xf32> to vector<8x64xf32>
    %206 = arith.mulf %205, %196 : vector<8x64xf32>
    %207 = arith.addf %204, %206 : vector<8x64xf32>
    %208 = math.tanh %207 : vector<8x64xf32>
    %209 = arith.mulf %202, %208 : vector<8x64xf32>
    %c7_i32 = arith.constant 7 : i32
    %210 = vector.broadcast %c7_i32 : i32 to vector<8x64xi32>
    %211 = arith.cmpi eq, %15, %210 : vector<8x64xi32>
    %212 = arith.select %211, %209, %184 : vector<8x64xi1>, vector<8x64xf32>
    %c56 = arith.constant 56 : index
    %c0_41 = arith.constant 0 : index
    %213 = vector.load %arg11[%c56, %c0_41] : memref<80x256xf32, #tpu.memory_space<vmem>>, vector<8x256xf32>
    %214 = arith.truncf %209 : vector<8x64xf32> to vector<8x64xbf16>
    %cst_42 = arith.constant dense<0.000000e+00> : vector<8x256xf32>
    %215 = tpu.matmul %214, %14, %cst_42 {dimension_numbers = #tpu.dot_dimension_numbers<[1], [0], [0], [1], [0, 0, 1, 1], [], []>} : vector<8x64xbf16>, vector<64x256xbf16>, vector<8x256xf32> -> vector<8x256xf32>
    %216 = arith.addf %213, %215 : vector<8x256xf32>
    %217 = vector.extract_strided_slice %216 {offsets = [0, 0], sizes = [8, 128], strides = [1, 1]} : vector<8x256xf32> to vector<8x128xf32>
    %218 = arith.negf %217 : vector<8x128xf32>
    %219 = math.exp %218 : vector<8x128xf32>
    %cst_43 = arith.constant 1.000000e+00 : f32
    %220 = vector.broadcast %cst_43 : f32 to vector<8x128xf32>
    %221 = arith.addf %220, %219 : vector<8x128xf32>
    %222 = arith.divf %220, %221 : vector<8x128xf32>
    %223 = vector.extract_strided_slice %216 {offsets = [0, 128], sizes = [8, 64], strides = [1, 1]} : vector<8x256xf32> to vector<8x64xf32>
    %224 = math.tanh %223 : vector<8x64xf32>
    %225 = vector.extract_strided_slice %216 {offsets = [0, 192], sizes = [8, 64], strides = [1, 1]} : vector<8x256xf32> to vector<8x64xf32>
    %226 = arith.negf %225 : vector<8x64xf32>
    %227 = math.exp %226 : vector<8x64xf32>
    %cst_44 = arith.constant 1.000000e+00 : f32
    %228 = vector.broadcast %cst_44 : f32 to vector<8x64xf32>
    %229 = arith.addf %228, %227 : vector<8x64xf32>
    %230 = arith.divf %228, %229 : vector<8x64xf32>
    %231 = vector.extract_strided_slice %222 {offsets = [0, 64], sizes = [8, 64], strides = [1, 1]} : vector<8x128xf32> to vector<8x64xf32>
    %232 = arith.mulf %231, %207 : vector<8x64xf32>
    %233 = vector.extract_strided_slice %222 {offsets = [0, 0], sizes = [8, 64], strides = [1, 1]} : vector<8x128xf32> to vector<8x64xf32>
    %234 = arith.mulf %233, %224 : vector<8x64xf32>
    %235 = arith.addf %232, %234 : vector<8x64xf32>
    %236 = math.tanh %235 : vector<8x64xf32>
    %237 = arith.mulf %230, %236 : vector<8x64xf32>
    %c8_i32 = arith.constant 8 : i32
    %238 = vector.broadcast %c8_i32 : i32 to vector<8x64xi32>
    %239 = arith.cmpi eq, %15, %238 : vector<8x64xi32>
    %240 = arith.select %239, %237, %212 : vector<8x64xi1>, vector<8x64xf32>
    %c64 = arith.constant 64 : index
    %c0_45 = arith.constant 0 : index
    %241 = vector.load %arg11[%c64, %c0_45] : memref<80x256xf32, #tpu.memory_space<vmem>>, vector<8x256xf32>
    %242 = arith.truncf %237 : vector<8x64xf32> to vector<8x64xbf16>
    %cst_46 = arith.constant dense<0.000000e+00> : vector<8x256xf32>
    %243 = tpu.matmul %242, %14, %cst_46 {dimension_numbers = #tpu.dot_dimension_numbers<[1], [0], [0], [1], [0, 0, 1, 1], [], []>} : vector<8x64xbf16>, vector<64x256xbf16>, vector<8x256xf32> -> vector<8x256xf32>
    %244 = arith.addf %241, %243 : vector<8x256xf32>
    %245 = vector.extract_strided_slice %244 {offsets = [0, 0], sizes = [8, 128], strides = [1, 1]} : vector<8x256xf32> to vector<8x128xf32>
    %246 = arith.negf %245 : vector<8x128xf32>
    %247 = math.exp %246 : vector<8x128xf32>
    %cst_47 = arith.constant 1.000000e+00 : f32
    %248 = vector.broadcast %cst_47 : f32 to vector<8x128xf32>
    %249 = arith.addf %248, %247 : vector<8x128xf32>
    %250 = arith.divf %248, %249 : vector<8x128xf32>
    %251 = vector.extract_strided_slice %244 {offsets = [0, 128], sizes = [8, 64], strides = [1, 1]} : vector<8x256xf32> to vector<8x64xf32>
    %252 = math.tanh %251 : vector<8x64xf32>
    %253 = vector.extract_strided_slice %244 {offsets = [0, 192], sizes = [8, 64], strides = [1, 1]} : vector<8x256xf32> to vector<8x64xf32>
    %254 = arith.negf %253 : vector<8x64xf32>
    %255 = math.exp %254 : vector<8x64xf32>
    %cst_48 = arith.constant 1.000000e+00 : f32
    %256 = vector.broadcast %cst_48 : f32 to vector<8x64xf32>
    %257 = arith.addf %256, %255 : vector<8x64xf32>
    %258 = arith.divf %256, %257 : vector<8x64xf32>
    %259 = vector.extract_strided_slice %250 {offsets = [0, 64], sizes = [8, 64], strides = [1, 1]} : vector<8x128xf32> to vector<8x64xf32>
    %260 = arith.mulf %259, %235 : vector<8x64xf32>
    %261 = vector.extract_strided_slice %250 {offsets = [0, 0], sizes = [8, 64], strides = [1, 1]} : vector<8x128xf32> to vector<8x64xf32>
    %262 = arith.mulf %261, %252 : vector<8x64xf32>
    %263 = arith.addf %260, %262 : vector<8x64xf32>
    %264 = math.tanh %263 : vector<8x64xf32>
    %265 = arith.mulf %258, %264 : vector<8x64xf32>
    %c9_i32 = arith.constant 9 : i32
    %266 = vector.broadcast %c9_i32 : i32 to vector<8x64xi32>
    %267 = arith.cmpi eq, %15, %266 : vector<8x64xi32>
    %268 = arith.select %267, %265, %240 : vector<8x64xi1>, vector<8x64xf32>
    %c72 = arith.constant 72 : index
    %c0_49 = arith.constant 0 : index
    %269 = vector.load %arg11[%c72, %c0_49] : memref<80x256xf32, #tpu.memory_space<vmem>>, vector<8x256xf32>
    %270 = arith.truncf %265 : vector<8x64xf32> to vector<8x64xbf16>
    %cst_50 = arith.constant dense<0.000000e+00> : vector<8x256xf32>
    %271 = tpu.matmul %270, %14, %cst_50 {dimension_numbers = #tpu.dot_dimension_numbers<[1], [0], [0], [1], [0, 0, 1, 1], [], []>} : vector<8x64xbf16>, vector<64x256xbf16>, vector<8x256xf32> -> vector<8x256xf32>
    %272 = arith.addf %269, %271 : vector<8x256xf32>
    %273 = vector.extract_strided_slice %272 {offsets = [0, 0], sizes = [8, 128], strides = [1, 1]} : vector<8x256xf32> to vector<8x128xf32>
    %274 = arith.negf %273 : vector<8x128xf32>
    %275 = math.exp %274 : vector<8x128xf32>
    %cst_51 = arith.constant 1.000000e+00 : f32
    %276 = vector.broadcast %cst_51 : f32 to vector<8x128xf32>
    %277 = arith.addf %276, %275 : vector<8x128xf32>
    %278 = arith.divf %276, %277 : vector<8x128xf32>
    %279 = vector.extract_strided_slice %272 {offsets = [0, 128], sizes = [8, 64], strides = [1, 1]} : vector<8x256xf32> to vector<8x64xf32>
    %280 = math.tanh %279 : vector<8x64xf32>
    %281 = vector.extract_strided_slice %272 {offsets = [0, 192], sizes = [8, 64], strides = [1, 1]} : vector<8x256xf32> to vector<8x64xf32>
    %282 = arith.negf %281 : vector<8x64xf32>
    %283 = math.exp %282 : vector<8x64xf32>
    %cst_52 = arith.constant 1.000000e+00 : f32
    %284 = vector.broadcast %cst_52 : f32 to vector<8x64xf32>
    %285 = arith.addf %284, %283 : vector<8x64xf32>
    %286 = arith.divf %284, %285 : vector<8x64xf32>
    %287 = vector.extract_strided_slice %278 {offsets = [0, 64], sizes = [8, 64], strides = [1, 1]} : vector<8x128xf32> to vector<8x64xf32>
    %288 = arith.mulf %287, %263 : vector<8x64xf32>
    %289 = vector.extract_strided_slice %278 {offsets = [0, 0], sizes = [8, 64], strides = [1, 1]} : vector<8x128xf32> to vector<8x64xf32>
    %290 = arith.mulf %289, %280 : vector<8x64xf32>
    %291 = arith.addf %288, %290 : vector<8x64xf32>
    %292 = math.tanh %291 : vector<8x64xf32>
    %293 = arith.mulf %286, %292 : vector<8x64xf32>
    %c10_i32 = arith.constant 10 : i32
    %294 = vector.broadcast %c10_i32 : i32 to vector<8x64xi32>
    %295 = arith.cmpi eq, %15, %294 : vector<8x64xi32>
    %296 = arith.select %295, %293, %268 : vector<8x64xi1>, vector<8x64xf32>
    %c0_53 = arith.constant 0 : index
    %c0_54 = arith.constant 0 : index
    %297 = vector.load %arg6[%c0_53, %c0_54] : memref<64x16xf32, #tpu.memory_space<vmem>>, vector<64x16xf32>
    %cst_55 = arith.constant dense<0.000000e+00> : vector<8x16xf32>
    %298 = tpu.matmul %296, %297, %cst_55 {dimension_numbers = #tpu.dot_dimension_numbers<[1], [0], [0], [1], [0, 0, 1, 1], [], []>} : vector<8x64xf32>, vector<64x16xf32>, vector<8x16xf32> -> vector<8x16xf32>
    %c0_56 = arith.constant 0 : index
    %c0_57 = arith.constant 0 : index
    %299 = vector.load %arg7[%c0_56, %c0_57] : memref<1x16xf32, #tpu.memory_space<vmem>>, vector<1x16xf32>
    %300 = vector.broadcast %299 : vector<1x16xf32> to vector<8x16xf32>
    %301 = arith.addf %298, %300 : vector<8x16xf32>
    %cst_58 = arith.constant 0.000000e+00 : f32
    %302 = vector.broadcast %cst_58 : f32 to vector<8x16xf32>
    %303 = arith.cmpf ogt, %301, %302 : vector<8x16xf32>
    %cst_59 = arith.constant 0.00999999977 : f32
    %304 = vector.broadcast %cst_59 : f32 to vector<8x16xf32>
    %305 = arith.mulf %304, %301 : vector<8x16xf32>
    %306 = arith.select %303, %301, %305 : vector<8x16xi1>, vector<8x16xf32>
    %c0_60 = arith.constant 0 : index
    %c0_61 = arith.constant 0 : index
    %307 = vector.load %arg8[%c0_60, %c0_61] : memref<16x3xf32, #tpu.memory_space<vmem>>, vector<16x3xf32>
    %cst_62 = arith.constant dense<0.000000e+00> : vector<8x3xf32>
    %308 = tpu.matmul %306, %307, %cst_62 {dimension_numbers = #tpu.dot_dimension_numbers<[1], [0], [0], [1], [0, 0, 1, 1], [], []>} : vector<8x16xf32>, vector<16x3xf32>, vector<8x3xf32> -> vector<8x3xf32>
    %c0_63 = arith.constant 0 : index
    %c0_64 = arith.constant 0 : index
    %309 = vector.load %arg9[%c0_63, %c0_64] : memref<1x3xf32, #tpu.memory_space<vmem>>, vector<1x3xf32>
    %310 = vector.broadcast %309 : vector<1x3xf32> to vector<8x3xf32>
    %311 = arith.addf %308, %310 : vector<8x3xf32>
    %312 = arith.negf %311 : vector<8x3xf32>
    %313 = math.exp %312 : vector<8x3xf32>
    %cst_65 = arith.constant 1.000000e+00 : f32
    %314 = vector.broadcast %cst_65 : f32 to vector<8x3xf32>
    %315 = arith.addf %314, %313 : vector<8x3xf32>
    %316 = arith.divf %314, %315 : vector<8x3xf32>
    %c0_66 = arith.constant 0 : index
    %c0_67 = arith.constant 0 : index
    %317 = vector.load %arg10[%c0_66, %c0_67] : memref<8x3xf32, #tpu.memory_space<vmem>>, vector<8x3xf32>
    tpu.vector_store %arg10[%c0_66, %c0_67], %316 {strides = array<i32>} : memref<8x3xf32, #tpu.memory_space<vmem>>, vector<8x3xf32>,
    return
  }
  func.func @transform_0(%arg0: i32) -> (i32, i32) {
    %c0_i32 = arith.constant 0 : i32
    %c0_i32_0 = arith.constant 0 : i32
    %c0_i32_1 = arith.constant 0 : i32
    return %c0_i32, %c0_i32_0 : i32, i32
  }
  func.func @transform_1(%arg0: i32) -> (i32, i32) {
    %c0_i32 = arith.constant 0 : i32
    %c0_i32_0 = arith.constant 0 : i32
    %c0_i32_1 = arith.constant 0 : i32
    return %c0_i32, %c0_i32_0 : i32, i32
  }
  func.func @transform_2(%arg0: i32) -> (i32, i32) {
    %c0_i32 = arith.constant 0 : i32
    %c0_i32_0 = arith.constant 0 : i32
    %c0_i32_1 = arith.constant 0 : i32
    return %c0_i32, %c0_i32_0 : i32, i32
  }
  func.func @transform_3(%arg0: i32) -> (i32, i32) {
    %c0_i32 = arith.constant 0 : i32
    %c0_i32_0 = arith.constant 0 : i32
    %c0_i32_1 = arith.constant 0 : i32
    return %c0_i32, %c0_i32_0 : i32, i32
  }
  func.func @transform_4(%arg0: i32) -> (i32, i32) {
    %c0_i32 = arith.constant 0 : i32
    %c0_i32_0 = arith.constant 0 : i32
    %c0_i32_1 = arith.constant 0 : i32
    return %c0_i32, %c0_i32_0 : i32, i32
  }
  func.func @transform_5(%arg0: i32) -> (i32, i32) {
    %c0_i32 = arith.constant 0 : i32
    %c0_i32_0 = arith.constant 0 : i32
    %c0_i32_1 = arith.constant 0 : i32
    return %c0_i32, %c0_i32_0 : i32, i32
  }
  func.func @transform_6(%arg0: i32) -> (i32, i32) {
    %c0_i32 = arith.constant 0 : i32
    %c0_i32_0 = arith.constant 0 : i32
    %c0_i32_1 = arith.constant 0 : i32
    return %c0_i32, %c0_i32_0 : i32, i32
  }
  func.func @transform_7(%arg0: i32) -> (i32, i32) {
    %c0_i32 = arith.constant 0 : i32
    %c0_i32_0 = arith.constant 0 : i32
    %c0_i32_1 = arith.constant 0 : i32
    return %c0_i32, %c0_i32_0 : i32, i32
  }
  func.func @transform_8(%arg0: i32) -> (i32, i32) {
    %c0_i32 = arith.constant 0 : i32
    %c0_i32_0 = arith.constant 0 : i32
    %c0_i32_1 = arith.constant 0 : i32
    return %c0_i32, %c0_i32_0 : i32, i32
  }
  func.func @transform_9(%arg0: i32) -> (i32, i32) {
    %c0_i32 = arith.constant 0 : i32
    %c0_i32_0 = arith.constant 0 : i32
    %c0_i32_1 = arith.constant 0 : i32
    return %c0_i32, %c0_i32_0 : i32, i32
  }
}

</mosaic_0001>

<llo_original>
// kernel: forward.1
$region0: #{forward.1}
  #allocation0 [shape = 'u32[]', space=smem, size = 0x4, offset = 0x4, fixed_abs, tag = 'smem constant byte address 0x4 - core index']
  #allocation1 [shape = 'u32[144,128]{1,0:T(1,128)}', space=vmem, size = 0x12000, scoped, tag = 'internal scratch']
  #allocation2 [shape = 'f32[80,256]{1,0:T(8,128)}', space=vmem, size = 0x14000, scoped, tag = 'scratch operand']
  %s0 = inlined_call_operand.vmem [shape: s32[80,1], index: 0, kind: input, shape index: {}]
  %s1 = inlined_call_operand.vmem [shape: s32[80,1], index: 1, kind: input, shape index: {}]
  %s2 = inlined_call_operand.vmem [shape: bf16[48,256], index: 2, kind: input, shape index: {}]
  %s3 = inlined_call_operand.vmem [shape: s32[8,64], index: 3, kind: input, shape index: {}]
  %s4 = inlined_call_operand.vmem [shape: bf16[64,256], index: 4, kind: input, shape index: {}]
  %s5 = inlined_call_operand.vmem [shape: f32[64,16], index: 5, kind: input, shape index: {}]
  %s6 = inlined_call_operand.vmem [shape: f32[1,16], index: 6, kind: input, shape index: {}]
  %s7 = inlined_call_operand.vmem [shape: f32[16,3], index: 7, kind: input, shape index: {}]
  %s8 = inlined_call_operand.vmem [shape: f32[1,3], index: 8, kind: input, shape index: {}]
  %s9 = inlined_call_operand.vmem [shape: f32[8,3], index: 9, kind: output, shape index: {}]
  %s10 = sld [smem:[#allocation0]]
  $region46: #{forward.1} parent=0
    _
  %s12 = ssub.s32 1, %s10
  %s13 = scalar_select 0, %s12, %s10
  // Predicated region
  $region2: #{forward.1} parent=0 // pred_check
    _
  $region3: #{forward.1} parent=0 // pred_check_branch
    %15 = sbr.rel (0) target = $region5
  $region4: #{forward.1} parent=0 // pred_region
    _
  $region5: #{forward.1} parent=0 // pred_fallthru
    _
  // Predicated region
  $region6: #{forward.1} parent=0 // pred_check
    _
  $region7: #{forward.1} parent=0 // pred_check_branch
    %17 = sbr.rel (0) target = $region9
  $region8: #{forward.1} parent=0 // pred_region
    _
  $region9: #{forward.1} parent=0 // pred_fallthru
    _
  // Predicated region
  $region10: #{forward.1} parent=0 // pred_check
    _
  $region11: #{forward.1} parent=0 // pred_check_branch
    %19 = sbr.rel (0) target = $region13
  $region12: #{forward.1} parent=0 // pred_region
    _
  $region13: #{forward.1} parent=0 // pred_fallthru
    _
  // Predicated region
  $region14: #{forward.1} parent=0 // pred_check
    _
  $region15: #{forward.1} parent=0 // pred_check_branch
    %21 = sbr.rel (0) target = $region17
  $region16: #{forward.1} parent=0 // pred_region
    _
  $region17: #{forward.1} parent=0 // pred_fallthru
    _
  // Predicated region
  $region18: #{forward.1} parent=0 // pred_check
    _
  $region19: #{forward.1} parent=0 // pred_check_branch
    %23 = sbr.rel (0) target = $region21
  $region20: #{forward.1} parent=0 // pred_region
    _
  $region21: #{forward.1} parent=0 // pred_fallthru
    _
  // Predicated region
  $region22: #{forward.1} parent=0 // pred_check
    _
  $region23: #{forward.1} parent=0 // pred_check_branch
    %25 = sbr.rel (0) target = $region25
  $region24: #{forward.1} parent=0 // pred_region
    _
  $region25: #{forward.1} parent=0 // pred_fallthru
    _
  // Predicated region
  $region26: #{forward.1} parent=0 // pred_check
    _
  $region27: #{forward.1} parent=0 // pred_check_branch
    %27 = sbr.rel (0) target = $region29
  $region28: #{forward.1} parent=0 // pred_region
    _
  $region29: #{forward.1} parent=0 // pred_fallthru
    _
  // Predicated region
  $region30: #{forward.1} parent=0 // pred_check
    _
  $region31: #{forward.1} parent=0 // pred_check_branch
    %29 = sbr.rel (0) target = $region33
  $region32: #{forward.1} parent=0 // pred_region
    _
  $region33: #{forward.1} parent=0 // pred_fallthru
    _
  // Predicated region
  $region34: #{forward.1} parent=0 // pred_check
    _
  $region35: #{forward.1} parent=0 // pred_check_branch
    %31 = sbr.rel (0) target = $region37
  $region36: #{forward.1} parent=0 // pred_region
    _
  $region37: #{forward.1} parent=0 // pred_fallthru
    _
  %v33 = vlaneseq
  %v34 = vand.u32 %v33, 127
  %v35 = vld [vmem:[%s0] sm:$0xff]
  %v36 = vld [vmem:[%s0 + $0x8] sm:$0xff]
  %v37 = vld [vmem:[%s0 + $0x10] sm:$0xff]
  %v38 = vld [vmem:[%s0 + $0x18] sm:$0xff]
  %v39 = vld [vmem:[%s0 + $0x20] sm:$0xff]
  %v40 = vld [vmem:[%s0 + $0x28] sm:$0xff]
  %v41 = vld [vmem:[%s0 + $0x30] sm:$0xff]
  %v42 = vld [vmem:[%s0 + $0x38] sm:$0xff]
  %v43 = vld [vmem:[%s0 + $0x40] sm:$0xff]
  %v44 = vld [vmem:[%s0 + $0x48] sm:$0xff]
  %45 = vset.pattern.permute.xlu0 0
  %46 = vperm.xlu0 %45, %v35
  %v47 = vpop.permute.xlu0 %46
  %48 = vset.pattern.permute.xlu0 0
  %49 = vperm.xlu0 %48, %v36
  %v50 = vpop.permute.xlu0 %49
  %51 = vset.pattern.permute.xlu0 0
  %52 = vperm.xlu0 %51, %v37
  %v53 = vpop.permute.xlu0 %52
  %54 = vset.pattern.permute.xlu0 0
  %55 = vperm.xlu0 %54, %v38
  %v56 = vpop.permute.xlu0 %55
  %57 = vset.pattern.permute.xlu0 0
  %58 = vperm.xlu0 %57, %v39
  %v59 = vpop.permute.xlu0 %58
  %60 = vset.pattern.permute.xlu0 0
  %61 = vperm.xlu0 %60, %v40
  %v62 = vpop.permute.xlu0 %61
  %63 = vset.pattern.permute.xlu0 0
  %64 = vperm.xlu0 %63, %v41
  %v65 = vpop.permute.xlu0 %64
  %66 = vset.pattern.permute.xlu0 0
  %67 = vperm.xlu0 %66, %v42
  %v68 = vpop.permute.xlu0 %67
  %69 = vset.pattern.permute.xlu0 0
  %70 = vperm.xlu0 %69, %v43
  %v71 = vpop.permute.xlu0 %70
  %72 = vset.pattern.permute.xlu0 0
  %73 = vperm.xlu0 %72, %v44
  %v74 = vpop.permute.xlu0 %73
  %vm75 = vcmp.eq.s32.totalorder %v34, %v47
  %vm76 = vcmp.eq.s32.totalorder %v34, %v50
  %vm77 = vcmp.eq.s32.totalorder %v34, %v53
  %vm78 = vcmp.eq.s32.totalorder %v34, %v56
  %vm79 = vcmp.eq.s32.totalorder %v34, %v59
  %vm80 = vcmp.eq.s32.totalorder %v34, %v62
  %vm81 = vcmp.eq.s32.totalorder %v34, %v65
  %vm82 = vcmp.eq.s32.totalorder %v34, %v68
  %vm83 = vcmp.eq.s32.totalorder %v34, %v71
  %vm84 = vcmp.eq.s32.totalorder %v34, %v74
  %v85 = vld [vmem:[%s1] sm:$0xff]
  %v86 = vld [vmem:[%s1 + $0x8] sm:$0xff]
  %v87 = vld [vmem:[%s1 + $0x10] sm:$0xff]
  %v88 = vld [vmem:[%s1 + $0x18] sm:$0xff]
  %v89 = vld [vmem:[%s1 + $0x20] sm:$0xff]
  %v90 = vld [vmem:[%s1 + $0x28] sm:$0xff]
  %v91 = vld [vmem:[%s1 + $0x30] sm:$0xff]
  %v92 = vld [vmem:[%s1 + $0x38] sm:$0xff]
  %v93 = vld [vmem:[%s1 + $0x40] sm:$0xff]
  %v94 = vld [vmem:[%s1 + $0x48] sm:$0xff]
  %95 = vset.pattern.permute.xlu0 0
  %96 = vperm.xlu0 %95, %v85
  %v97 = vpop.permute.xlu0 %96
  %98 = vset.pattern.permute.xlu0 0
  %99 = vperm.xlu0 %98, %v86
  %v100 = vpop.permute.xlu0 %99
  %101 = vset.pattern.permute.xlu0 0
  %102 = vperm.xlu0 %101, %v87
  %v103 = vpop.permute.xlu0 %102
  %104 = vset.pattern.permute.xlu0 0
  %105 = vperm.xlu0 %104, %v88
  %v106 = vpop.permute.xlu0 %105
  %107 = vset.pattern.permute.xlu0 0
  %108 = vperm.xlu0 %107, %v89
  %v109 = vpop.permute.xlu0 %108
  %110 = vset.pattern.permute.xlu0 0
  %111 = vperm.xlu0 %110, %v90
  %v112 = vpop.permute.xlu0 %111
  %113 = vset.pattern.permute.xlu0 0
  %114 = vperm.xlu0 %113, %v91
  %v115 = vpop.permute.xlu0 %114
  %116 = vset.pattern.permute.xlu0 0
  %117 = vperm.xlu0 %116, %v92
  %v118 = vpop.permute.xlu0 %117
  %119 = vset.pattern.permute.xlu0 0
  %120 = vperm.xlu0 %119, %v93
  %v121 = vpop.permute.xlu0 %120
  %122 = vset.pattern.permute.xlu0 0
  %123 = vperm.xlu0 %122, %v94
  %v124 = vpop.permute.xlu0 %123
  %vm125 = vcmp.eq.s32.totalorder %v34, %v97
  %vm126 = vcmp.eq.s32.totalorder %v34, %v100
  %vm127 = vcmp.eq.s32.totalorder %v34, %v103
  %vm128 = vcmp.eq.s32.totalorder %v34, %v106
  %vm129 = vcmp.eq.s32.totalorder %v34, %v109
  %vm130 = vcmp.eq.s32.totalorder %v34, %v112
  %vm131 = vcmp.eq.s32.totalorder %v34, %v115
  %vm132 = vcmp.eq.s32.totalorder %v34, %v118
  %vm133 = vcmp.eq.s32.totalorder %v34, %v121
  %vm134 = vcmp.eq.s32.totalorder %v34, %v124
  %vm135 = vmor %vm75, %vm125
  %vm136 = vmor %vm76, %vm126
  %vm137 = vmor %vm77, %vm127
  %vm138 = vmor %vm78, %vm128
  %vm139 = vmor %vm79, %vm129
  %vm140 = vmor %vm80, %vm130
  %vm141 = vmor %vm81, %vm131
  %vm142 = vmor %vm82, %vm132
  %vm143 = vmor %vm83, %vm133
  %vm144 = vmor %vm84, %vm134
  %v145 = vsel %vm135, 1, 0
  %v146 = vsel %vm136, 1, 0
  %v147 = vsel %vm137, 1, 0
  %v148 = vsel %vm138, 1, 0
  %v149 = vsel %vm139, 1, 0
  %v150 = vsel %vm140, 1, 0
  %v151 = vsel %vm141, 1, 0
  %v152 = vsel %vm142, 1, 0
  %v153 = vsel %vm143, 1, 0
  %v154 = vsel %vm144, 1, 0
  %v155 = vcvt.s32.f32 %v145
  %v156 = vcvt.s32.f32 %v146
  %v157 = vcvt.s32.f32 %v147
  %v158 = vcvt.s32.f32 %v148
  %v159 = vcvt.s32.f32 %v149
  %v160 = vcvt.s32.f32 %v150
  %v161 = vcvt.s32.f32 %v151
  %v162 = vcvt.s32.f32 %v152
  %v163 = vcvt.s32.f32 %v153
  %v164 = vcvt.s32.f32 %v154
  %v165 = vpack.c.bf16 %v156, %v155
  %v166 = vpack.c.bf16 %v158, %v157
  %v167 = vpack.c.bf16 %v160, %v159
  %v168 = vpack.c.bf16 %v162, %v161
  %v169 = vpack.c.bf16 %v164, %v163
  %v170 = vld [vmem:[%s2] sm:$0xff]
  %v171 = vld [vmem:[%s2 + $0x8] sm:$0xff]
  %v172 = vld [vmem:[%s2 + $0x10] sm:$0xff]
  %v173 = vld [vmem:[%s2 + $0x18] sm:$0xff]
  %v174 = vld [vmem:[%s2 + $0x20] sm:$0xff]
  %v175 = vld [vmem:[%s2 + $0x28] sm:$0xff]
  %v182 = vunpack.c.l.b16 %v170
  %v183 = vunpack.c.h.b16 %v170
  %v184 = vunpack.c.l.b16 %v171
  %v185 = vunpack.c.h.b16 %v171
  %v186 = vunpack.c.l.b16 %v172
  %v187 = vunpack.c.h.b16 %v172
  %v188 = vunpack.c.l.b16 %v173
  %v189 = vunpack.c.h.b16 %v173
  %v190 = vunpack.c.l.b16 %v174
  %v191 = vunpack.c.h.b16 %v174
  %v192 = vunpack.c.l.b16 %v175
  %v193 = vunpack.c.h.b16 %v175
  %v194 = vpack.c.b16 %v184, %v182
  %v195 = vpack.c.b16 %v185, %v183
  %v196 = vpack.c.b16 %v188, %v186
  %v197 = vpack.c.b16 %v189, %v187
  %v198 = vpack.c.b16 %v192, %v190
  %v199 = vpack.c.b16 %v193, %v191
  %vm206 = vcmask 392192
  %v208 = vsel %vm206, %v165, 0
  %v211 = vsel %vm206, %v166, 0
  %v214 = vsel %vm206, %v167, 0
  %v217 = vsel %vm206, %v168, 0
  %v220 = vsel %vm206, %v169, 0
  %222 = vmatprep.subr.bf16.mxu0 0
  %223 = vmatpush1.bf16.msra.mxu0 0
  %224 = vmatprep.subr.bf16.mxu0 0
  %225 = vmatpush1.bf16.msra.mxu0 0
  %226 = vmatprep.subr.bf16.mxu0 0
  %227 = vmatpush1.bf16.msra.mxu0 0
  %228 = vmatprep.subr.bf16.mxu0 0
  %229 = vmatpush1.bf16.msra.mxu0 0
  %230 = vmatprep.subr.bf16.mxu0 0
  %231 = vmatpush1.bf16.msra.mxu0 0
  %232 = vmatprep.subr.bf16.mxu0 %v199
  %233 = vmatpush1.bf16.msra.mxu0 %v198
  %234 = vmatprep.subr.bf16.mxu0 %v197
  %235 = vmatpush1.bf16.msra.mxu0 %v196
  %236 = vmatprep.subr.bf16.mxu0 %v195
  %237 = vmatpush1.bf16.msra.mxu0 %v194
  %238 = vmatprep.subr.bf16.mxu0 0
  %239 = vmatpush2.bf16.msra.mxu0 0
  %240 = vmatprep.subr.bf16.mxu0 0
  %241 = vmatpush2.bf16.msra.mxu0 0
  %242 = vmatprep.subr.bf16.mxu0 0
  %243 = vmatpush2.bf16.msra.mxu0 0
  %244 = vmatprep.subr.bf16.mxu0 0
  %245 = vmatpush2.bf16.msra.mxu0 0
  %246 = vmatprep.subr.bf16.mxu0 0
  %247 = vmatpush2.bf16.msra.mxu0 0
  %248 = vmatprep.subr.bf16.mxu0 0
  %249 = vmatpush2.bf16.msra.mxu0 0
  %250 = vmatprep.subr.bf16.mxu0 0
  %251 = vmatpush2.bf16.msra.mxu0 0
  %252 = vmatprep.subr.bf16.mxu0 0
  %253 = vmatpush2.bf16.msra.mxu0 0
  %254 = vmatprep.mubr.bf16.mxu0 0
  %255 = vmatmul.mubr.bf16.gmra.mxu0 %v208
  %v256 = vpop.f32.mrf.mxu0
  %v257 = vadd.f32 0.0, %v256
  %v258 = vpop.f32.mrf.mxu0
  %v259 = vadd.f32 0.0, %v258
  %v260 = vpop.f32.mrf.mxu0
  %v261 = vadd.f32 0.0, %v260
  %v262 = vpop.f32.mrf.mxu0
  %v263 = vadd.f32 0.0, %v262
  %264 = vmatprep.mubr.bf16.mxu0 0
  %265 = vmatmul.mubr.bf16.gmra.mxu0 %v211
  %v266 = vpop.f32.mrf.mxu0
  %v267 = vadd.f32 0.0, %v266
  %v268 = vpop.f32.mrf.mxu0
  %v269 = vadd.f32 0.0, %v268
  %v270 = vpop.f32.mrf.mxu0
  %v271 = vadd.f32 0.0, %v270
  %v272 = vpop.f32.mrf.mxu0
  %v273 = vadd.f32 0.0, %v272
  %274 = vmatprep.mubr.bf16.mxu0 0
  %275 = vmatmul.mubr.bf16.gmra.mxu0 %v214
  %v276 = vpop.f32.mrf.mxu0
  %v277 = vadd.f32 0.0, %v276
  %v278 = vpop.f32.mrf.mxu0
  %v279 = vadd.f32 0.0, %v278
  %v280 = vpop.f32.mrf.mxu0
  %v281 = vadd.f32 0.0, %v280
  %v282 = vpop.f32.mrf.mxu0
  %v283 = vadd.f32 0.0, %v282
  %284 = vmatprep.mubr.bf16.mxu0 0
  %285 = vmatmul.mubr.bf16.gmra.mxu0 %v217
  %v286 = vpop.f32.mrf.mxu0
  %v287 = vadd.f32 0.0, %v286
  %v288 = vpop.f32.mrf.mxu0
  %v289 = vadd.f32 0.0, %v288
  %v290 = vpop.f32.mrf.mxu0
  %v291 = vadd.f32 0.0, %v290
  %v292 = vpop.f32.mrf.mxu0
  %v293 = vadd.f32 0.0, %v292
  %294 = vmatprep.mubr.bf16.mxu0 0
  %295 = vmatmul.mubr.bf16.gmra.mxu0 %v220
  %v296 = vpop.f32.mrf.mxu0
  %v297 = vadd.f32 0.0, %v296
  %v298 = vpop.f32.mrf.mxu0
  %v299 = vadd.f32 0.0, %v298
  %v300 = vpop.f32.mrf.mxu0
  %v301 = vadd.f32 0.0, %v300
  %v302 = vpop.f32.mrf.mxu0
  %v303 = vadd.f32 0.0, %v302
  %304 = vdwg.mxu0
  %305 = vst [vmem:[#allocation2] sm:$0xff] %v257
  %306 = vst [vmem:[#allocation2 + $0x8] sm:$0xff] %v259
  %307 = vst [vmem:[#allocation2 + $0x10] sm:$0xff] %v261
  %308 = vst [vmem:[#allocation2 + $0x18] sm:$0xff] %v263
  %309 = vst [vmem:[#allocation2 + $0x20] sm:$0xff] %v267
  %310 = vst [vmem:[#allocation2 + $0x28] sm:$0xff] %v269
  %311 = vst [vmem:[#allocation2 + $0x30] sm:$0xff] %v271
  %312 = vst [vmem:[#allocation2 + $0x38] sm:$0xff] %v273
  %313 = vst [vmem:[#allocation2 + $0x40] sm:$0xff] %v277
  %314 = vst [vmem:[#allocation2 + $0x48] sm:$0xff] %v279
  %315 = vst [vmem:[#allocation2 + $0x50] sm:$0xff] %v281
  %316 = vst [vmem:[#allocation2 + $0x58] sm:$0xff] %v283
  %317 = vst [vmem:[#allocation2 + $0x60] sm:$0xff] %v287
  %318 = vst [vmem:[#allocation2 + $0x68] sm:$0xff] %v289
  %319 = vst [vmem:[#allocation2 + $0x70] sm:$0xff] %v291
  %320 = vst [vmem:[#allocation2 + $0x78] sm:$0xff] %v293
  %321 = vst [vmem:[#allocation2 + $0x80] sm:$0xff] %v297
  %322 = vst [vmem:[#allocation2 + $0x88] sm:$0xff] %v299
  %323 = vst [vmem:[#allocation2 + $0x90] sm:$0xff] %v301
  %324 = vst [vmem:[#allocation2 + $0x98] sm:$0xff] %v303
  %v325 = vld [vmem:[%s4] sm:$0xff]
  %v326 = vld [vmem:[%s4 + $0x8] sm:$0xff]
  %v327 = vld [vmem:[%s4 + $0x10] sm:$0xff]
  %v328 = vld [vmem:[%s4 + $0x18] sm:$0xff]
  %v329 = vld [vmem:[%s4 + $0x20] sm:$0xff]
  %v330 = vld [vmem:[%s4 + $0x28] sm:$0xff]
  %v331 = vld [vmem:[%s4 + $0x30] sm:$0xff]
  %v332 = vld [vmem:[%s4 + $0x38] sm:$0xff]
  %v333 = vld [vmem:[%s3] sm:$0xff]
  %v334 = vld [vmem:[#allocation2] sm:$0xff]
  %v335 = vld [vmem:[#allocation2 + $0x8] sm:$0xff]
  %v344 = vunpack.c.l.b16 %v325
  %v345 = vunpack.c.h.b16 %v325
  %v346 = vunpack.c.l.b16 %v326
  %v347 = vunpack.c.h.b16 %v326
  %v348 = vunpack.c.l.b16 %v327
  %v349 = vunpack.c.h.b16 %v327
  %v350 = vunpack.c.l.b16 %v328
  %v351 = vunpack.c.h.b16 %v328
  %v352 = vunpack.c.l.b16 %v329
  %v353 = vunpack.c.h.b16 %v329
  %v354 = vunpack.c.l.b16 %v330
  %v355 = vunpack.c.h.b16 %v330
  %v356 = vunpack.c.l.b16 %v331
  %v357 = vunpack.c.h.b16 %v331
  %v358 = vunpack.c.l.b16 %v332
  %v359 = vunpack.c.h.b16 %v332
  %v360 = vpack.c.b16 %v346, %v344
  %v361 = vpack.c.b16 %v347, %v345
  %v362 = vpack.c.b16 %v350, %v348
  %v363 = vpack.c.b16 %v351, %v349
  %v364 = vpack.c.b16 %v354, %v352
  %v365 = vpack.c.b16 %v355, %v353
  %v366 = vpack.c.b16 %v358, %v356
  %v367 = vpack.c.b16 %v359, %v357
  %vm376 = vcmask 523264
  %v378 = vsel %vm376, 0, 0
  %380 = vmatprep.subr.bf16.mxu0 0
  %381 = vmatpush1.bf16.msra.mxu0 0
  %382 = vmatprep.subr.bf16.mxu0 0
  %383 = vmatpush1.bf16.msra.mxu0 0
  %384 = vmatprep.subr.bf16.mxu0 0
  %385 = vmatpush1.bf16.msra.mxu0 0
  %386 = vmatprep.subr.bf16.mxu0 0
  %387 = vmatpush1.bf16.msra.mxu0 0
  %388 = vmatprep.subr.bf16.mxu0 %v367
  %389 = vmatpush1.bf16.msra.mxu0 %v366
  %390 = vmatprep.subr.bf16.mxu0 %v365
  %391 = vmatpush1.bf16.msra.mxu0 %v364
  %392 = vmatprep.subr.bf16.mxu0 %v363
  %393 = vmatpush1.bf16.msra.mxu0 %v362
  %394 = vmatprep.subr.bf16.mxu0 %v361
  %395 = vmatpush1.bf16.msra.mxu0 %v360
  %396 = vmatprep.subr.bf16.mxu0 0
  %397 = vmatpush2.bf16.msra.mxu0 0
  %398 = vmatprep.subr.bf16.mxu0 0
  %399 = vmatpush2.bf16.msra.mxu0 0
  %400 = vmatprep.subr.bf16.mxu0 0
  %401 = vmatpush2.bf16.msra.mxu0 0
  %402 = vmatprep.subr.bf16.mxu0 0
  %403 = vmatpush2.bf16.msra.mxu0 0
  %404 = vmatprep.subr.bf16.mxu0 0
  %405 = vmatpush2.bf16.msra.mxu0 0
  %406 = vmatprep.subr.bf16.mxu0 0
  %407 = vmatpush2.bf16.msra.mxu0 0
  %408 = vmatprep.subr.bf16.mxu0 0
  %409 = vmatpush2.bf16.msra.mxu0 0
  %410 = vmatprep.subr.bf16.mxu0 0
  %411 = vmatpush2.bf16.msra.mxu0 0
  %412 = vmatprep.mubr.bf16.mxu0 0
  %413 = vmatmul.mubr.bf16.gmra.mxu0 %v378
  %v414 = vpop.f32.mrf.mxu0
  %v415 = vadd.f32 0.0, %v414
  %v416 = vpop.f32.mrf.mxu0
  %v417 = vadd.f32 0.0, %v416
  %v418 = vpop.f32.mrf.mxu0
  %v419 = vpop.f32.mrf.mxu0
  %420 = vdwg.mxu0
  %v421 = vadd.f32 %v334, %v415
  %v422 = vadd.f32 %v335, %v417
  %v423 = vxor.u32 %v421, 2147483648
  %v424 = vmul.f32 %v423, 1.442695
  %v425 = vpow.pop %v424
  %v426 = vadd.f32 %v425, 1.0
  %v427 = vrcp.pop %v426
  %v428 = vmul.f32 1.0, %v427
  %v429 = vtanh.pop %v422
  %v430 = vxor.u32 %v422, 2147483648
  %v431 = vmul.f32 %v430, 1.442695
  %v432 = vpow.pop %v431
  %v433 = vadd.f32 %v432, 1.0
  %v434 = vrcp.pop %v433
  %v435 = vmul.f32 1.0, %v434
  %v436 = vmul.f32 %v428, 0.0
  %v437 = vmul.f32 %v428, %v429
  %439 = vrot.lane.b32.xlu0 %v437, 64
  %v440 = vpop.permute.xlu0 %439
  %v442 = vadd.f32 %v436, %v440
  %v443 = vtanh.pop %v442
  %v444 = vmul.f32 %v435, %v443
  %vm445 = vcmp.eq.s32.totalorder %v333, 1
  %447 = vrot.lane.b32.xlu0 %v444, 64
  %v448 = vpop.permute.xlu0 %447
  %v450 = vsel %vm445, %v448, 0.0
  %v451 = vld [vmem:[#allocation2 + $0x10] sm:$0xff]
  %v452 = vld [vmem:[#allocation2 + $0x18] sm:$0xff]
  %v453 = vpack.c.bf16 %v444, %v444
  %455 = vrot.lane.b32.xlu0 %v453, 64
  %v456 = vpop.permute.xlu0 %455
  %v458 = vsel %vm376, %v456, 0
  %460 = vmatprep.subr.bf16.mxu0 0
  %461 = vmatpush1.bf16.msra.mxu0 0
  %462 = vmatprep.subr.bf16.mxu0 0
  %463 = vmatpush1.bf16.msra.mxu0 0
  %464 = vmatprep.subr.bf16.mxu0 0
  %465 = vmatpush1.bf16.msra.mxu0 0
  %466 = vmatprep.subr.bf16.mxu0 0
  %467 = vmatpush1.bf16.msra.mxu0 0
  %468 = vmatprep.subr.bf16.mxu0 %v367
  %469 = vmatpush1.bf16.msra.mxu0 %v366
  %470 = vmatprep.subr.bf16.mxu0 %v365
  %471 = vmatpush1.bf16.msra.mxu0 %v364
  %472 = vmatprep.subr.bf16.mxu0 %v363
  %473 = vmatpush1.bf16.msra.mxu0 %v362
  %474 = vmatprep.subr.bf16.mxu0 %v361
  %475 = vmatpush1.bf16.msra.mxu0 %v360
  %476 = vmatprep.subr.bf16.mxu0 0
  %477 = vmatpush2.bf16.msra.mxu0 0
  %478 = vmatprep.subr.bf16.mxu0 0
  %479 = vmatpush2.bf16.msra.mxu0 0
  %480 = vmatprep.subr.bf16.mxu0 0
  %481 = vmatpush2.bf16.msra.mxu0 0
  %482 = vmatprep.subr.bf16.mxu0 0
  %483 = vmatpush2.bf16.msra.mxu0 0
  %484 = vmatprep.subr.bf16.mxu0 0
  %485 = vmatpush2.bf16.msra.mxu0 0
  %486 = vmatprep.subr.bf16.mxu0 0
  %487 = vmatpush2.bf16.msra.mxu0 0
  %488 = vmatprep.subr.bf16.mxu0 0
  %489 = vmatpush2.bf16.msra.mxu0 0
  %490 = vmatprep.subr.bf16.mxu0 0
  %491 = vmatpush2.bf16.msra.mxu0 0
  %492 = vmatprep.mubr.bf16.mxu0 0
  %493 = vmatmul.mubr.bf16.gmra.mxu0 %v458
  %v494 = vpop.f32.mrf.mxu0
  %v495 = vadd.f32 0.0, %v494
  %v496 = vpop.f32.mrf.mxu0
  %v497 = vadd.f32 0.0, %v496
  %v498 = vpop.f32.mrf.mxu0
  %v499 = vpop.f32.mrf.mxu0
  %500 = vdwg.mxu0
  %v501 = vadd.f32 %v451, %v495
  %v502 = vadd.f32 %v452, %v497
  %v503 = vxor.u32 %v501, 2147483648
  %v504 = vmul.f32 %v503, 1.442695
  %v505 = vpow.pop %v504
  %v506 = vadd.f32 %v505, 1.0
  %v507 = vrcp.pop %v506
  %v508 = vmul.f32 1.0, %v507
  %v509 = vtanh.pop %v502
  %v510 = vxor.u32 %v502, 2147483648
  %v511 = vmul.f32 %v510, 1.442695
  %v512 = vpow.pop %v511
  %v513 = vadd.f32 %v512, 1.0
  %v514 = vrcp.pop %v513
  %v515 = vmul.f32 1.0, %v514
  %v516 = vmul.f32 %v508, %v442
  %v517 = vmul.f32 %v508, %v509
  %519 = vrot.lane.b32.xlu0 %v517, 64
  %v520 = vpop.permute.xlu0 %519
  %v522 = vadd.f32 %v516, %v520
  %v523 = vtanh.pop %v522
  %v524 = vmul.f32 %v515, %v523
  %vm525 = vcmp.eq.s32.totalorder %v333, 2
  %527 = vrot.lane.b32.xlu0 %v524, 64
  %v528 = vpop.permute.xlu0 %527
  %v530 = vsel %vm525, %v528, %v450
  %v531 = vld [vmem:[#allocation2 + $0x20] sm:$0xff]
  %v532 = vld [vmem:[#allocation2 + $0x28] sm:$0xff]
  %v533 = vpack.c.bf16 %v524, %v524
  %535 = vrot.lane.b32.xlu0 %v533, 64
  %v536 = vpop.permute.xlu0 %535
  %v538 = vsel %vm376, %v536, 0
  %540 = vmatprep.subr.bf16.mxu0 0
  %541 = vmatpush1.bf16.msra.mxu0 0
  %542 = vmatprep.subr.bf16.mxu0 0
  %543 = vmatpush1.bf16.msra.mxu0 0
  %544 = vmatprep.subr.bf16.mxu0 0
  %545 = vmatpush1.bf16.msra.mxu0 0
  %546 = vmatprep.subr.bf16.mxu0 0
  %547 = vmatpush1.bf16.msra.mxu0 0
  %548 = vmatprep.subr.bf16.mxu0 %v367
  %549 = vmatpush1.bf16.msra.mxu0 %v366
  %550 = vmatprep.subr.bf16.mxu0 %v365
  %551 = vmatpush1.bf16.msra.mxu0 %v364
  %552 = vmatprep.subr.bf16.mxu0 %v363
  %553 = vmatpush1.bf16.msra.mxu0 %v362
  %554 = vmatprep.subr.bf16.mxu0 %v361
  %555 = vmatpush1.bf16.msra.mxu0 %v360
  %556 = vmatprep.subr.bf16.mxu0 0
  %557 = vmatpush2.bf16.msra.mxu0 0
  %558 = vmatprep.subr.bf16.mxu0 0
  %559 = vmatpush2.bf16.msra.mxu0 0
  %560 = vmatprep.subr.bf16.mxu0 0
  %561 = vmatpush2.bf16.msra.mxu0 0
  %562 = vmatprep.subr.bf16.mxu0 0
  %563 = vmatpush2.bf16.msra.mxu0 0
  %564 = vmatprep.subr.bf16.mxu0 0
  %565 = vmatpush2.bf16.msra.mxu0 0
  %566 = vmatprep.subr.bf16.mxu0 0
  %567 = vmatpush2.bf16.msra.mxu0 0
  %568 = vmatprep.subr.bf16.mxu0 0
  %569 = vmatpush2.bf16.msra.mxu0 0
  %570 = vmatprep.subr.bf16.mxu0 0
  %571 = vmatpush2.bf16.msra.mxu0 0
  %572 = vmatprep.mubr.bf16.mxu0 0
  %573 = vmatmul.mubr.bf16.gmra.mxu0 %v538
  %v574 = vpop.f32.mrf.mxu0
  %v575 = vadd.f32 0.0, %v574
  %v576 = vpop.f32.mrf.mxu0
  %v577 = vadd.f32 0.0, %v576
  %v578 = vpop.f32.mrf.mxu0
  %v579 = vpop.f32.mrf.mxu0
  %580 = vdwg.mxu0
  %v581 = vadd.f32 %v531, %v575
  %v582 = vadd.f32 %v532, %v577
  %v583 = vxor.u32 %v581, 2147483648
  %v584 = vmul.f32 %v583, 1.442695
  %v585 = vpow.pop %v584
  %v586 = vadd.f32 %v585, 1.0
  %v587 = vrcp.pop %v586
  %v588 = vmul.f32 1.0, %v587
  %v589 = vtanh.pop %v582
  %v590 = vxor.u32 %v582, 2147483648
  %v591 = vmul.f32 %v590, 1.442695
  %v592 = vpow.pop %v591
  %v593 = vadd.f32 %v592, 1.0
  %v594 = vrcp.pop %v593
  %v595 = vmul.f32 1.0, %v594
  %v596 = vmul.f32 %v588, %v522
  %v597 = vmul.f32 %v588, %v589
  %599 = vrot.lane.b32.xlu0 %v597, 64
  %v600 = vpop.permute.xlu0 %599
  %v602 = vadd.f32 %v596, %v600
  %v603 = vtanh.pop %v602
  %v604 = vmul.f32 %v595, %v603
  %vm605 = vcmp.eq.s32.totalorder %v333, 3
  %607 = vrot.lane.b32.xlu0 %v604, 64
  %v608 = vpop.permute.xlu0 %607
  %v610 = vsel %vm605, %v608, %v530
  %v611 = vld [vmem:[#allocation2 + $0x30] sm:$0xff]
  %v612 = vld [vmem:[#allocation2 + $0x38] sm:$0xff]
  %v613 = vpack.c.bf16 %v604, %v604
  %615 = vrot.lane.b32.xlu0 %v613, 64
  %v616 = vpop.permute.xlu0 %615
  %v618 = vsel %vm376, %v616, 0
  %620 = vmatprep.subr.bf16.mxu0 0
  %621 = vmatpush1.bf16.msra.mxu0 0
  %622 = vmatprep.subr.bf16.mxu0 0
  %623 = vmatpush1.bf16.msra.mxu0 0
  %624 = vmatprep.subr.bf16.mxu0 0
  %625 = vmatpush1.bf16.msra.mxu0 0
  %626 = vmatprep.subr.bf16.mxu0 0
  %627 = vmatpush1.bf16.msra.mxu0 0
  %628 = vmatprep.subr.bf16.mxu0 %v367
  %629 = vmatpush1.bf16.msra.mxu0 %v366
  %630 = vmatprep.subr.bf16.mxu0 %v365
  %631 = vmatpush1.bf16.msra.mxu0 %v364
  %632 = vmatprep.subr.bf16.mxu0 %v363
  %633 = vmatpush1.bf16.msra.mxu0 %v362
  %634 = vmatprep.subr.bf16.mxu0 %v361
  %635 = vmatpush1.bf16.msra.mxu0 %v360
  %636 = vmatprep.subr.bf16.mxu0 0
  %637 = vmatpush2.bf16.msra.mxu0 0
  %638 = vmatprep.subr.bf16.mxu0 0
  %639 = vmatpush2.bf16.msra.mxu0 0
  %640 = vmatprep.subr.bf16.mxu0 0
  %641 = vmatpush2.bf16.msra.mxu0 0
  %642 = vmatprep.subr.bf16.mxu0 0
  %643 = vmatpush2.bf16.msra.mxu0 0
  %644 = vmatprep.subr.bf16.mxu0 0
  %645 = vmatpush2.bf16.msra.mxu0 0
  %646 = vmatprep.subr.bf16.mxu0 0
  %647 = vmatpush2.bf16.msra.mxu0 0
  %648 = vmatprep.subr.bf16.mxu0 0
  %649 = vmatpush2.bf16.msra.mxu0 0
  %650 = vmatprep.subr.bf16.mxu0 0
  %651 = vmatpush2.bf16.msra.mxu0 0
  %652 = vmatprep.mubr.bf16.mxu0 0
  %653 = vmatmul.mubr.bf16.gmra.mxu0 %v618
  %v654 = vpop.f32.mrf.mxu0
  %v655 = vadd.f32 0.0, %v654
  %v656 = vpop.f32.mrf.mxu0
  %v657 = vadd.f32 0.0, %v656
  %v658 = vpop.f32.mrf.mxu0
  %v659 = vpop.f32.mrf.mxu0
  %660 = vdwg.mxu0
  %v661 = vadd.f32 %v611, %v655
  %v662 = vadd.f32 %v612, %v657
  %v663 = vxor.u32 %v661, 2147483648
  %v664 = vmul.f32 %v663, 1.442695
  %v665 = vpow.pop %v664
  %v666 = vadd.f32 %v665, 1.0
  %v667 = vrcp.pop %v666
  %v668 = vmul.f32 1.0, %v667
  %v669 = vtanh.pop %v662
  %v670 = vxor.u32 %v662, 2147483648
  %v671 = vmul.f32 %v670, 1.442695
  %v672 = vpow.pop %v671
  %v673 = vadd.f32 %v672, 1.0
  %v674 = vrcp.pop %v673
  %v675 = vmul.f32 1.0, %v674
  %v676 = vmul.f32 %v668, %v602
  %v677 = vmul.f32 %v668, %v669
  %679 = vrot.lane.b32.xlu0 %v677, 64
  %v680 = vpop.permute.xlu0 %679
  %v682 = vadd.f32 %v676, %v680
  %v683 = vtanh.pop %v682
  %v684 = vmul.f32 %v675, %v683
  %vm685 = vcmp.eq.s32.totalorder %v333, 4
  %687 = vrot.lane.b32.xlu0 %v684, 64
  %v688 = vpop.permute.xlu0 %687
  %v690 = vsel %vm685, %v688, %v610
  %v691 = vld [vmem:[#allocation2 + $0x40] sm:$0xff]
  %v692 = vld [vmem:[#allocation2 + $0x48] sm:$0xff]
  %v693 = vpack.c.bf16 %v684, %v684
  %695 = vrot.lane.b32.xlu0 %v693, 64
  %v696 = vpop.permute.xlu0 %695
  %v698 = vsel %vm376, %v696, 0
  %700 = vmatprep.subr.bf16.mxu0 0
  %701 = vmatpush1.bf16.msra.mxu0 0
  %702 = vmatprep.subr.bf16.mxu0 0
  %703 = vmatpush1.bf16.msra.mxu0 0
  %704 = vmatprep.subr.bf16.mxu0 0
  %705 = vmatpush1.bf16.msra.mxu0 0
  %706 = vmatprep.subr.bf16.mxu0 0
  %707 = vmatpush1.bf16.msra.mxu0 0
  %708 = vmatprep.subr.bf16.mxu0 %v367
  %709 = vmatpush1.bf16.msra.mxu0 %v366
  %710 = vmatprep.subr.bf16.mxu0 %v365
  %711 = vmatpush1.bf16.msra.mxu0 %v364
  %712 = vmatprep.subr.bf16.mxu0 %v363
  %713 = vmatpush1.bf16.msra.mxu0 %v362
  %714 = vmatprep.subr.bf16.mxu0 %v361
  %715 = vmatpush1.bf16.msra.mxu0 %v360
  %716 = vmatprep.subr.bf16.mxu0 0
  %717 = vmatpush2.bf16.msra.mxu0 0
  %718 = vmatprep.subr.bf16.mxu0 0
  %719 = vmatpush2.bf16.msra.mxu0 0
  %720 = vmatprep.subr.bf16.mxu0 0
  %721 = vmatpush2.bf16.msra.mxu0 0
  %722 = vmatprep.subr.bf16.mxu0 0
  %723 = vmatpush2.bf16.msra.mxu0 0
  %724 = vmatprep.subr.bf16.mxu0 0
  %725 = vmatpush2.bf16.msra.mxu0 0
  %726 = vmatprep.subr.bf16.mxu0 0
  %727 = vmatpush2.bf16.msra.mxu0 0
  %728 = vmatprep.subr.bf16.mxu0 0
  %729 = vmatpush2.bf16.msra.mxu0 0
  %730 = vmatprep.subr.bf16.mxu0 0
  %731 = vmatpush2.bf16.msra.mxu0 0
  %732 = vmatprep.mubr.bf16.mxu0 0
  %733 = vmatmul.mubr.bf16.gmra.mxu0 %v698
  %v734 = vpop.f32.mrf.mxu0
  %v735 = vadd.f32 0.0, %v734
  %v736 = vpop.f32.mrf.mxu0
  %v737 = vadd.f32 0.0, %v736
  %v738 = vpop.f32.mrf.mxu0
  %v739 = vpop.f32.mrf.mxu0
  %740 = vdwg.mxu0
  %v741 = vadd.f32 %v691, %v735
  %v742 = vadd.f32 %v692, %v737
  %v743 = vxor.u32 %v741, 2147483648
  %v744 = vmul.f32 %v743, 1.442695
  %v745 = vpow.pop %v744
  %v746 = vadd.f32 %v745, 1.0
  %v747 = vrcp.pop %v746
  %v748 = vmul.f32 1.0, %v747
  %v749 = vtanh.pop %v742
  %v750 = vxor.u32 %v742, 2147483648
  %v751 = vmul.f32 %v750, 1.442695
  %v752 = vpow.pop %v751
  %v753 = vadd.f32 %v752, 1.0
  %v754 = vrcp.pop %v753
  %v755 = vmul.f32 1.0, %v754
  %v756 = vmul.f32 %v748, %v682
  %v757 = vmul.f32 %v748, %v749
  %759 = vrot.lane.b32.xlu0 %v757, 64
  %v760 = vpop.permute.xlu0 %759
  %v762 = vadd.f32 %v756, %v760
  %v763 = vtanh.pop %v762
  %v764 = vmul.f32 %v755, %v763
  %vm765 = vcmp.eq.s32.totalorder %v333, 5
  %767 = vrot.lane.b32.xlu0 %v764, 64
  %v768 = vpop.permute.xlu0 %767
  %v770 = vsel %vm765, %v768, %v690
  %v771 = vld [vmem:[#allocation2 + $0x50] sm:$0xff]
  %v772 = vld [vmem:[#allocation2 + $0x58] sm:$0xff]
  %v773 = vpack.c.bf16 %v764, %v764
  %775 = vrot.lane.b32.xlu0 %v773, 64
  %v776 = vpop.permute.xlu0 %775
  %v778 = vsel %vm376, %v776, 0
  %780 = vmatprep.subr.bf16.mxu0 0
  %781 = vmatpush1.bf16.msra.mxu0 0
  %782 = vmatprep.subr.bf16.mxu0 0
  %783 = vmatpush1.bf16.msra.mxu0 0
  %784 = vmatprep.subr.bf16.mxu0 0
  %785 = vmatpush1.bf16.msra.mxu0 0
  %786 = vmatprep.subr.bf16.mxu0 0
  %787 = vmatpush1.bf16.msra.mxu0 0
  %788 = vmatprep.subr.bf16.mxu0 %v367
  %789 = vmatpush1.bf16.msra.mxu0 %v366
  %790 = vmatprep.subr.bf16.mxu0 %v365
  %791 = vmatpush1.bf16.msra.mxu0 %v364
  %792 = vmatprep.subr.bf16.mxu0 %v363
  %793 = vmatpush1.bf16.msra.mxu0 %v362
  %794 = vmatprep.subr.bf16.mxu0 %v361
  %795 = vmatpush1.bf16.msra.mxu0 %v360
  %796 = vmatprep.subr.bf16.mxu0 0
  %797 = vmatpush2.bf16.msra.mxu0 0
  %798 = vmatprep.subr.bf16.mxu0 0
  %799 = vmatpush2.bf16.msra.mxu0 0
  %800 = vmatprep.subr.bf16.mxu0 0
  %801 = vmatpush2.bf16.msra.mxu0 0
  %802 = vmatprep.subr.bf16.mxu0 0
  %803 = vmatpush2.bf16.msra.mxu0 0
  %804 = vmatprep.subr.bf16.mxu0 0
  %805 = vmatpush2.bf16.msra.mxu0 0
  %806 = vmatprep.subr.bf16.mxu0 0
  %807 = vmatpush2.bf16.msra.mxu0 0
  %808 = vmatprep.subr.bf16.mxu0 0
  %809 = vmatpush2.bf16.msra.mxu0 0
  %810 = vmatprep.subr.bf16.mxu0 0
  %811 = vmatpush2.bf16.msra.mxu0 0
  %812 = vmatprep.mubr.bf16.mxu0 0
  %813 = vmatmul.mubr.bf16.gmra.mxu0 %v778
  %v814 = vpop.f32.mrf.mxu0
  %v815 = vadd.f32 0.0, %v814
  %v816 = vpop.f32.mrf.mxu0
  %v817 = vadd.f32 0.0, %v816
  %v818 = vpop.f32.mrf.mxu0
  %v819 = vpop.f32.mrf.mxu0
  %820 = vdwg.mxu0
  %v821 = vadd.f32 %v771, %v815
  %v822 = vadd.f32 %v772, %v817
  %v823 = vxor.u32 %v821, 2147483648
  %v824 = vmul.f32 %v823, 1.442695
  %v825 = vpow.pop %v824
  %v826 = vadd.f32 %v825, 1.0
  %v827 = vrcp.pop %v826
  %v828 = vmul.f32 1.0, %v827
  %v829 = vtanh.pop %v822
  %v830 = vxor.u32 %v822, 2147483648
  %v831 = vmul.f32 %v830, 1.442695
  %v832 = vpow.pop %v831
  %v833 = vadd.f32 %v832, 1.0
  %v834 = vrcp.pop %v833
  %v835 = vmul.f32 1.0, %v834
  %v836 = vmul.f32 %v828, %v762
  %v837 = vmul.f32 %v828, %v829
  %839 = vrot.lane.b32.xlu0 %v837, 64
  %v840 = vpop.permute.xlu0 %839
  %v842 = vadd.f32 %v836, %v840
  %v843 = vtanh.pop %v842
  %v844 = vmul.f32 %v835, %v843
  %vm845 = vcmp.eq.s32.totalorder %v333, 6
  %847 = vrot.lane.b32.xlu0 %v844, 64
  %v848 = vpop.permute.xlu0 %847
  %v850 = vsel %vm845, %v848, %v770
  %v851 = vld [vmem:[#allocation2 + $0x60] sm:$0xff]
  %v852 = vld [vmem:[#allocation2 + $0x68] sm:$0xff]
  %v853 = vpack.c.bf16 %v844, %v844
  %855 = vrot.lane.b32.xlu0 %v853, 64
  %v856 = vpop.permute.xlu0 %855
  %v858 = vsel %vm376, %v856, 0
  %860 = vmatprep.subr.bf16.mxu0 0
  %861 = vmatpush1.bf16.msra.mxu0 0
  %862 = vmatprep.subr.bf16.mxu0 0
  %863 = vmatpush1.bf16.msra.mxu0 0
  %864 = vmatprep.subr.bf16.mxu0 0
  %865 = vmatpush1.bf16.msra.mxu0 0
  %866 = vmatprep.subr.bf16.mxu0 0
  %867 = vmatpush1.bf16.msra.mxu0 0
  %868 = vmatprep.subr.bf16.mxu0 %v367
  %869 = vmatpush1.bf16.msra.mxu0 %v366
  %870 = vmatprep.subr.bf16.mxu0 %v365
  %871 = vmatpush1.bf16.msra.mxu0 %v364
  %872 = vmatprep.subr.bf16.mxu0 %v363
  %873 = vmatpush1.bf16.msra.mxu0 %v362
  %874 = vmatprep.subr.bf16.mxu0 %v361
  %875 = vmatpush1.bf16.msra.mxu0 %v360
  %876 = vmatprep.subr.bf16.mxu0 0
  %877 = vmatpush2.bf16.msra.mxu0 0
  %878 = vmatprep.subr.bf16.mxu0 0
  %879 = vmatpush2.bf16.msra.mxu0 0
  %880 = vmatprep.subr.bf16.mxu0 0
  %881 = vmatpush2.bf16.msra.mxu0 0
  %882 = vmatprep.subr.bf16.mxu0 0
  %883 = vmatpush2.bf16.msra.mxu0 0
  %884 = vmatprep.subr.bf16.mxu0 0
  %885 = vmatpush2.bf16.msra.mxu0 0
  %886 = vmatprep.subr.bf16.mxu0 0
  %887 = vmatpush2.bf16.msra.mxu0 0
  %888 = vmatprep.subr.bf16.mxu0 0
  %889 = vmatpush2.bf16.msra.mxu0 0
  %890 = vmatprep.subr.bf16.mxu0 0
  %891 = vmatpush2.bf16.msra.mxu0 0
  %892 = vmatprep.mubr.bf16.mxu0 0
  %893 = vmatmul.mubr.bf16.gmra.mxu0 %v858
  %v894 = vpop.f32.mrf.mxu0
  %v895 = vadd.f32 0.0, %v894
  %v896 = vpop.f32.mrf.mxu0
  %v897 = vadd.f32 0.0, %v896
  %v898 = vpop.f32.mrf.mxu0
  %v899 = vpop.f32.mrf.mxu0
  %900 = vdwg.mxu0
  %v901 = vadd.f32 %v851, %v895
  %v902 = vadd.f32 %v852, %v897
  %v903 = vxor.u32 %v901, 2147483648
  %v904 = vmul.f32 %v903, 1.442695
  %v905 = vpow.pop %v904
  %v906 = vadd.f32 %v905, 1.0
  %v907 = vrcp.pop %v906
  %v908 = vmul.f32 1.0, %v907
  %v909 = vtanh.pop %v902
  %v910 = vxor.u32 %v902, 2147483648
  %v911 = vmul.f32 %v910, 1.442695
  %v912 = vpow.pop %v911
  %v913 = vadd.f32 %v912, 1.0
  %v914 = vrcp.pop %v913
  %v915 = vmul.f32 1.0, %v914
  %v916 = vmul.f32 %v908, %v842
  %v917 = vmul.f32 %v908, %v909
  %919 = vrot.lane.b32.xlu0 %v917, 64
  %v920 = vpop.permute.xlu0 %919
  %v922 = vadd.f32 %v916, %v920
  %v923 = vtanh.pop %v922
  %v924 = vmul.f32 %v915, %v923
  %vm925 = vcmp.eq.s32.totalorder %v333, 7
  %927 = vrot.lane.b32.xlu0 %v924, 64
  %v928 = vpop.permute.xlu0 %927
  %v930 = vsel %vm925, %v928, %v850
  %v931 = vld [vmem:[#allocation2 + $0x70] sm:$0xff]
  %v932 = vld [vmem:[#allocation2 + $0x78] sm:$0xff]
  %v933 = vpack.c.bf16 %v924, %v924
  %935 = vrot.lane.b32.xlu0 %v933, 64
  %v936 = vpop.permute.xlu0 %935
  %v938 = vsel %vm376, %v936, 0
  %940 = vmatprep.subr.bf16.mxu0 0
  %941 = vmatpush1.bf16.msra.mxu0 0
  %942 = vmatprep.subr.bf16.mxu0 0
  %943 = vmatpush1.bf16.msra.mxu0 0
  %944 = vmatprep.subr.bf16.mxu0 0
  %945 = vmatpush1.bf16.msra.mxu0 0
  %946 = vmatprep.subr.bf16.mxu0 0
  %947 = vmatpush1.bf16.msra.mxu0 0
  %948 = vmatprep.subr.bf16.mxu0 %v367
  %949 = vmatpush1.bf16.msra.mxu0 %v366
  %950 = vmatprep.subr.bf16.mxu0 %v365
  %951 = vmatpush1.bf16.msra.mxu0 %v364
  %952 = vmatprep.subr.bf16.mxu0 %v363
  %953 = vmatpush1.bf16.msra.mxu0 %v362
  %954 = vmatprep.subr.bf16.mxu0 %v361
  %955 = vmatpush1.bf16.msra.mxu0 %v360
  %956 = vmatprep.subr.bf16.mxu0 0
  %957 = vmatpush2.bf16.msra.mxu0 0
  %958 = vmatprep.subr.bf16.mxu0 0
  %959 = vmatpush2.bf16.msra.mxu0 0
  %960 = vmatprep.subr.bf16.mxu0 0
  %961 = vmatpush2.bf16.msra.mxu0 0
  %962 = vmatprep.subr.bf16.mxu0 0
  %963 = vmatpush2.bf16.msra.mxu0 0
  %964 = vmatprep.subr.bf16.mxu0 0
  %965 = vmatpush2.bf16.msra.mxu0 0
  %966 = vmatprep.subr.bf16.mxu0 0
  %967 = vmatpush2.bf16.msra.mxu0 0
  %968 = vmatprep.subr.bf16.mxu0 0
  %969 = vmatpush2.bf16.msra.mxu0 0
  %970 = vmatprep.subr.bf16.mxu0 0
  %971 = vmatpush2.bf16.msra.mxu0 0
  %972 = vmatprep.mubr.bf16.mxu0 0
  %973 = vmatmul.mubr.bf16.gmra.mxu0 %v938
  %v974 = vpop.f32.mrf.mxu0
  %v975 = vadd.f32 0.0, %v974
  %v976 = vpop.f32.mrf.mxu0
  %v977 = vadd.f32 0.0, %v976
  %v978 = vpop.f32.mrf.mxu0
  %v979 = vpop.f32.mrf.mxu0
  %980 = vdwg.mxu0
  %v981 = vadd.f32 %v931, %v975
  %v982 = vadd.f32 %v932, %v977
  %v983 = vxor.u32 %v981, 2147483648
  %v984 = vmul.f32 %v983, 1.442695
  %v985 = vpow.pop %v984
  %v986 = vadd.f32 %v985, 1.0
  %v987 = vrcp.pop %v986
  %v988 = vmul.f32 1.0, %v987
  %v989 = vtanh.pop %v982
  %v990 = vxor.u32 %v982, 2147483648
  %v991 = vmul.f32 %v990, 1.442695
  %v992 = vpow.pop %v991
  %v993 = vadd.f32 %v992, 1.0
  %v994 = vrcp.pop %v993
  %v995 = vmul.f32 1.0, %v994
  %v996 = vmul.f32 %v988, %v922
  %v997 = vmul.f32 %v988, %v989
  %999 = vrot.lane.b32.xlu0 %v997, 64
  %v1000 = vpop.permute.xlu0 %999
  %v1002 = vadd.f32 %v996, %v1000
  %v1003 = vtanh.pop %v1002
  %v1004 = vmul.f32 %v995, %v1003
  %vm1005 = vcmp.eq.s32.totalorder %v333, 8
  %1007 = vrot.lane.b32.xlu0 %v1004, 64
  %v1008 = vpop.permute.xlu0 %1007
  %v1010 = vsel %vm1005, %v1008, %v930
  %v1011 = vld [vmem:[#allocation2 + $0x80] sm:$0xff]
  %v1012 = vld [vmem:[#allocation2 + $0x88] sm:$0xff]
  %v1013 = vpack.c.bf16 %v1004, %v1004
  %1015 = vrot.lane.b32.xlu0 %v1013, 64
  %v1016 = vpop.permute.xlu0 %1015
  %v1018 = vsel %vm376, %v1016, 0
  %1020 = vmatprep.subr.bf16.mxu0 0
  %1021 = vmatpush1.bf16.msra.mxu0 0
  %1022 = vmatprep.subr.bf16.mxu0 0
  %1023 = vmatpush1.bf16.msra.mxu0 0
  %1024 = vmatprep.subr.bf16.mxu0 0
  %1025 = vmatpush1.bf16.msra.mxu0 0
  %1026 = vmatprep.subr.bf16.mxu0 0
  %1027 = vmatpush1.bf16.msra.mxu0 0
  %1028 = vmatprep.subr.bf16.mxu0 %v367
  %1029 = vmatpush1.bf16.msra.mxu0 %v366
  %1030 = vmatprep.subr.bf16.mxu0 %v365
  %1031 = vmatpush1.bf16.msra.mxu0 %v364
  %1032 = vmatprep.subr.bf16.mxu0 %v363
  %1033 = vmatpush1.bf16.msra.mxu0 %v362
  %1034 = vmatprep.subr.bf16.mxu0 %v361
  %1035 = vmatpush1.bf16.msra.mxu0 %v360
  %1036 = vmatprep.subr.bf16.mxu0 0
  %1037 = vmatpush2.bf16.msra.mxu0 0
  %1038 = vmatprep.subr.bf16.mxu0 0
  %1039 = vmatpush2.bf16.msra.mxu0 0
  %1040 = vmatprep.subr.bf16.mxu0 0
  %1041 = vmatpush2.bf16.msra.mxu0 0
  %1042 = vmatprep.subr.bf16.mxu0 0
  %1043 = vmatpush2.bf16.msra.mxu0 0
  %1044 = vmatprep.subr.bf16.mxu0 0
  %1045 = vmatpush2.bf16.msra.mxu0 0
  %1046 = vmatprep.subr.bf16.mxu0 0
  %1047 = vmatpush2.bf16.msra.mxu0 0
  %1048 = vmatprep.subr.bf16.mxu0 0
  %1049 = vmatpush2.bf16.msra.mxu0 0
  %1050 = vmatprep.subr.bf16.mxu0 0
  %1051 = vmatpush2.bf16.msra.mxu0 0
  %1052 = vmatprep.mubr.bf16.mxu0 0
  %1053 = vmatmul.mubr.bf16.gmra.mxu0 %v1018
  %v1054 = vpop.f32.mrf.mxu0
  %v1055 = vadd.f32 0.0, %v1054
  %v1056 = vpop.f32.mrf.mxu0
  %v1057 = vadd.f32 0.0, %v1056
  %v1058 = vpop.f32.mrf.mxu0
  %v1059 = vpop.f32.mrf.mxu0
  %1060 = vdwg.mxu0
  %v1061 = vadd.f32 %v1011, %v1055
  %v1062 = vadd.f32 %v1012, %v1057
  %v1063 = vxor.u32 %v1061, 2147483648
  %v1064 = vmul.f32 %v1063, 1.442695
  %v1065 = vpow.pop %v1064
  %v1066 = vadd.f32 %v1065, 1.0
  %v1067 = vrcp.pop %v1066
  %v1068 = vmul.f32 1.0, %v1067
  %v1069 = vtanh.pop %v1062
  %v1070 = vxor.u32 %v1062, 2147483648
  %v1071 = vmul.f32 %v1070, 1.442695
  %v1072 = vpow.pop %v1071
  %v1073 = vadd.f32 %v1072, 1.0
  %v1074 = vrcp.pop %v1073
  %v1075 = vmul.f32 1.0, %v1074
  %v1076 = vmul.f32 %v1068, %v1002
  %v1077 = vmul.f32 %v1068, %v1069
  %1079 = vrot.lane.b32.xlu0 %v1077, 64
  %v1080 = vpop.permute.xlu0 %1079
  %v1082 = vadd.f32 %v1076, %v1080
  %v1083 = vtanh.pop %v1082
  %v1084 = vmul.f32 %v1075, %v1083
  %vm1085 = vcmp.eq.s32.totalorder %v333, 9
  %1087 = vrot.lane.b32.xlu0 %v1084, 64
  %v1088 = vpop.permute.xlu0 %1087
  %v1090 = vsel %vm1085, %v1088, %v1010
  %v1091 = vld [vmem:[#allocation2 + $0x90] sm:$0xff]
  %v1092 = vld [vmem:[#allocation2 + $0x98] sm:$0xff]
  %v1093 = vpack.c.bf16 %v1084, %v1084
  %1095 = vrot.lane.b32.xlu0 %v1093, 64
  %v1096 = vpop.permute.xlu0 %1095
  %v1098 = vsel %vm376, %v1096, 0
  %1100 = vmatprep.subr.bf16.mxu0 0
  %1101 = vmatpush1.bf16.msra.mxu0 0
  %1102 = vmatprep.subr.bf16.mxu0 0
  %1103 = vmatpush1.bf16.msra.mxu0 0
  %1104 = vmatprep.subr.bf16.mxu0 0
  %1105 = vmatpush1.bf16.msra.mxu0 0
  %1106 = vmatprep.subr.bf16.mxu0 0
  %1107 = vmatpush1.bf16.msra.mxu0 0
  %1108 = vmatprep.subr.bf16.mxu0 %v367
  %1109 = vmatpush1.bf16.msra.mxu0 %v366
  %1110 = vmatprep.subr.bf16.mxu0 %v365
  %1111 = vmatpush1.bf16.msra.mxu0 %v364
  %1112 = vmatprep.subr.bf16.mxu0 %v363
  %1113 = vmatpush1.bf16.msra.mxu0 %v362
  %1114 = vmatprep.subr.bf16.mxu0 %v361
  %1115 = vmatpush1.bf16.msra.mxu0 %v360
  %1116 = vmatprep.subr.bf16.mxu0 0
  %1117 = vmatpush2.bf16.msra.mxu0 0
  %1118 = vmatprep.subr.bf16.mxu0 0
  %1119 = vmatpush2.bf16.msra.mxu0 0
  %1120 = vmatprep.subr.bf16.mxu0 0
  %1121 = vmatpush2.bf16.msra.mxu0 0
  %1122 = vmatprep.subr.bf16.mxu0 0
  %1123 = vmatpush2.bf16.msra.mxu0 0
  %1124 = vmatprep.subr.bf16.mxu0 0
  %1125 = vmatpush2.bf16.msra.mxu0 0
  %1126 = vmatprep.subr.bf16.mxu0 0
  %1127 = vmatpush2.bf16.msra.mxu0 0
  %1128 = vmatprep.subr.bf16.mxu0 0
  %1129 = vmatpush2.bf16.msra.mxu0 0
  %1130 = vmatprep.subr.bf16.mxu0 0
  %1131 = vmatpush2.bf16.msra.mxu0 0
  %1132 = vmatprep.mubr.bf16.mxu0 0
  %1133 = vmatmul.mubr.bf16.gmra.mxu0 %v1098
  %v1134 = vpop.f32.mrf.mxu0
  %v1135 = vadd.f32 0.0, %v1134
  %v1136 = vpop.f32.mrf.mxu0
  %v1137 = vadd.f32 0.0, %v1136
  %v1138 = vpop.f32.mrf.mxu0
  %v1139 = vpop.f32.mrf.mxu0
  %1140 = vdwg.mxu0
  %v1141 = vadd.f32 %v1091, %v1135
  %v1142 = vadd.f32 %v1092, %v1137
  %v1143 = vxor.u32 %v1141, 2147483648
  %v1144 = vmul.f32 %v1143, 1.442695
  %v1145 = vpow.pop %v1144
  %v1146 = vadd.f32 %v1145, 1.0
  %v1147 = vrcp.pop %v1146
  %v1148 = vmul.f32 1.0, %v1147
  %v1149 = vtanh.pop %v1142
  %v1150 = vxor.u32 %v1142, 2147483648
  %v1151 = vmul.f32 %v1150, 1.442695
  %v1152 = vpow.pop %v1151
  %v1153 = vadd.f32 %v1152, 1.0
  %v1154 = vrcp.pop %v1153
  %v1155 = vmul.f32 1.0, %v1154
  %v1156 = vmul.f32 %v1148, %v1082
  %v1157 = vmul.f32 %v1148, %v1149
  %1159 = vrot.lane.b32.xlu0 %v1157, 64
  %v1160 = vpop.permute.xlu0 %1159
  %v1162 = vadd.f32 %v1156, %v1160
  %v1163 = vtanh.pop %v1162
  %v1164 = vmul.f32 %v1155, %v1163
  %vm1165 = vcmp.eq.s32.totalorder %v333, 10
  %1167 = vrot.lane.b32.xlu0 %v1164, 64
  %v1168 = vpop.permute.xlu0 %1167
  %v1170 = vsel %vm1165, %v1168, %v1090
  %v1171 = vld [vmem:[%s5] sm:$0xff]
  %v1172 = vld [vmem:[%s5 + $0x8] sm:$0xff]
  %v1173 = vld [vmem:[%s5 + $0x10] sm:$0xff]
  %v1174 = vld [vmem:[%s5 + $0x18] sm:$0xff]
  %v1175 = vld [vmem:[%s5 + $0x20] sm:$0xff]
  %v1176 = vld [vmem:[%s5 + $0x28] sm:$0xff]
  %v1177 = vld [vmem:[%s5 + $0x30] sm:$0xff]
  %v1178 = vld [vmem:[%s5 + $0x38] sm:$0xff]
  %v1179 = vld [vmem:[%s6] sm:$0x1]
  %v1181 = vlaneseq
  %v1182 = vshrl.u32 %v1181, 7
  %v1183 = vsub.s32 0, %v1182
  %v1184 = vrot.slane %v1179, %v1183
  %v1187 = vsel %vm376, %v1170, 0
  %1189 = vmatprep.subr.mxu0 0.0
  %1190 = vmatpush1.msra.mxu0 0.0
  %1191 = vmatprep.subr.mxu0 0.0
  %1192 = vmatpush1.msra.mxu0 0.0
  %1193 = vmatprep.subr.mxu0 0.0
  %1194 = vmatpush1.msra.mxu0 0.0
  %1195 = vmatprep.subr.mxu0 0.0
  %1196 = vmatpush1.msra.mxu0 0.0
  %1197 = vmatprep.subr.mxu0 0.0
  %1198 = vmatpush1.msra.mxu0 0.0
  %1199 = vmatprep.subr.mxu0 0.0
  %1200 = vmatpush1.msra.mxu0 0.0
  %1201 = vmatprep.subr.mxu0 0.0
  %1202 = vmatpush1.msra.mxu0 0.0
  %1203 = vmatprep.subr.mxu0 0.0
  %1204 = vmatpush1.msra.mxu0 0.0
  %1205 = vmatprep.subr.mxu0 0.0
  %1206 = vmatpush1.msra.mxu0 %v1178
  %1207 = vmatprep.subr.mxu0 0.0
  %1208 = vmatpush1.msra.mxu0 %v1177
  %1209 = vmatprep.subr.mxu0 0.0
  %1210 = vmatpush1.msra.mxu0 %v1176
  %1211 = vmatprep.subr.mxu0 0.0
  %1212 = vmatpush1.msra.mxu0 %v1175
  %1213 = vmatprep.subr.mxu0 0.0
  %1214 = vmatpush1.msra.mxu0 %v1174
  %1215 = vmatprep.subr.mxu0 0.0
  %1216 = vmatpush1.msra.mxu0 %v1173
  %1217 = vmatprep.subr.mxu0 0.0
  %1218 = vmatpush1.msra.mxu0 %v1172
  %1219 = vmatprep.subr.mxu0 0.0
  %1220 = vmatpush1.msra.mxu0 %v1171
  %1221 = vmatprep.subr.mxu0 0.0
  %1222 = vmatpush2.msra.mxu0 0.0
  %1223 = vmatprep.subr.mxu0 0.0
  %1224 = vmatpush2.msra.mxu0 0.0
  %1225 = vmatprep.subr.mxu0 0.0
  %1226 = vmatpush2.msra.mxu0 0.0
  %1227 = vmatprep.subr.mxu0 0.0
  %1228 = vmatpush2.msra.mxu0 0.0
  %1229 = vmatprep.subr.mxu0 0.0
  %1230 = vmatpush2.msra.mxu0 0.0
  %1231 = vmatprep.subr.mxu0 0.0
  %1232 = vmatpush2.msra.mxu0 0.0
  %1233 = vmatprep.subr.mxu0 0.0
  %1234 = vmatpush2.msra.mxu0 0.0
  %1235 = vmatprep.subr.mxu0 0.0
  %1236 = vmatpush2.msra.mxu0 0.0
  %1237 = vmatprep.subr.mxu0 0.0
  %1238 = vmatpush2.msra.mxu0 0.0
  %1239 = vmatprep.subr.mxu0 0.0
  %1240 = vmatpush2.msra.mxu0 0.0
  %1241 = vmatprep.subr.mxu0 0.0
  %1242 = vmatpush2.msra.mxu0 0.0
  %1243 = vmatprep.subr.mxu0 0.0
  %1244 = vmatpush2.msra.mxu0 0.0
  %1245 = vmatprep.subr.mxu0 0.0
  %1246 = vmatpush2.msra.mxu0 0.0
  %1247 = vmatprep.subr.mxu0 0.0
  %1248 = vmatpush2.msra.mxu0 0.0
  %1249 = vmatprep.subr.mxu0 0.0
  %1250 = vmatpush2.msra.mxu0 0.0
  %1251 = vmatprep.subr.mxu0 0.0
  %1252 = vmatpush2.msra.mxu0 0.0
  %1253 = vmatprep.mubr.f32.mxu0 0.0
  %1254 = vmatmul.mubr.f32.gmra.mxu0 %v1187
  %v1255 = vpop.f32.mrf.mxu0
  %v1256 = vadd.f32 %v1184, %v1255
  %v1257 = vpop.f32.mrf.mxu0
  %1258 = vdwg.mxu0
  %vm1259 = vcmp.gt.f32.partialorder %v1256, 0.0
  %v1260 = vmul.f32 %v1256, 0.01
  %v1261 = vsel %vm1259, %v1256, %v1260
  %v1262 = vld [vmem:[%s7] sm:$0xff]
  %v1263 = vld [vmem:[%s7 + $0x8] sm:$0xff]
  %v1264 = vld [vmem:[%s8] sm:$0x1]
  %v1266 = vlaneseq
  %v1267 = vshrl.u32 %v1266, 7
  %v1268 = vsub.s32 0, %v1267
  %v1269 = vrot.slane %v1264, %v1268
  %vm1271 = vcmask 130048
  %v1273 = vsel %vm1271, %v1261, 0
  %1275 = vmatprep.subr.mxu0 0.0
  %1276 = vmatpush1.msra.mxu0 0.0
  %1277 = vmatprep.subr.mxu0 0.0
  %1278 = vmatpush1.msra.mxu0 0.0
  %1279 = vmatprep.subr.mxu0 0.0
  %1280 = vmatpush1.msra.mxu0 0.0
  %1281 = vmatprep.subr.mxu0 0.0
  %1282 = vmatpush1.msra.mxu0 0.0
  %1283 = vmatprep.subr.mxu0 0.0
  %1284 = vmatpush1.msra.mxu0 0.0
  %1285 = vmatprep.subr.mxu0 0.0
  %1286 = vmatpush1.msra.mxu0 0.0
  %1287 = vmatprep.subr.mxu0 0.0
  %1288 = vmatpush1.msra.mxu0 0.0
  %1289 = vmatprep.subr.mxu0 0.0
  %1290 = vmatpush1.msra.mxu0 0.0
  %1291 = vmatprep.subr.mxu0 0.0
  %1292 = vmatpush1.msra.mxu0 0.0
  %1293 = vmatprep.subr.mxu0 0.0
  %1294 = vmatpush1.msra.mxu0 0.0
  %1295 = vmatprep.subr.mxu0 0.0
  %1296 = vmatpush1.msra.mxu0 0.0
  %1297 = vmatprep.subr.mxu0 0.0
  %1298 = vmatpush1.msra.mxu0 0.0
  %1299 = vmatprep.subr.mxu0 0.0
  %1300 = vmatpush1.msra.mxu0 0.0
  %1301 = vmatprep.subr.mxu0 0.0
  %1302 = vmatpush1.msra.mxu0 0.0
  %1303 = vmatprep.subr.mxu0 0.0
  %1304 = vmatpush1.msra.mxu0 %v1263
  %1305 = vmatprep.subr.mxu0 0.0
  %1306 = vmatpush1.msra.mxu0 %v1262
  %1307 = vmatprep.subr.mxu0 0.0
  %1308 = vmatpush2.msra.mxu0 0.0
  %1309 = vmatprep.subr.mxu0 0.0
  %1310 = vmatpush2.msra.mxu0 0.0
  %1311 = vmatprep.subr.mxu0 0.0
  %1312 = vmatpush2.msra.mxu0 0.0
  %1313 = vmatprep.subr.mxu0 0.0
  %1314 = vmatpush2.msra.mxu0 0.0
  %1315 = vmatprep.subr.mxu0 0.0
  %1316 = vmatpush2.msra.mxu0 0.0
  %1317 = vmatprep.subr.mxu0 0.0
  %1318 = vmatpush2.msra.mxu0 0.0
  %1319 = vmatprep.subr.mxu0 0.0
  %1320 = vmatpush2.msra.mxu0 0.0
  %1321 = vmatprep.subr.mxu0 0.0
  %1322 = vmatpush2.msra.mxu0 0.0
  %1323 = vmatprep.subr.mxu0 0.0
  %1324 = vmatpush2.msra.mxu0 0.0
  %1325 = vmatprep.subr.mxu0 0.0
  %1326 = vmatpush2.msra.mxu0 0.0
  %1327 = vmatprep.subr.mxu0 0.0
  %1328 = vmatpush2.msra.mxu0 0.0
  %1329 = vmatprep.subr.mxu0 0.0
  %1330 = vmatpush2.msra.mxu0 0.0
  %1331 = vmatprep.subr.mxu0 0.0
  %1332 = vmatpush2.msra.mxu0 0.0
  %1333 = vmatprep.subr.mxu0 0.0
  %1334 = vmatpush2.msra.mxu0 0.0
  %1335 = vmatprep.subr.mxu0 0.0
  %1336 = vmatpush2.msra.mxu0 0.0
  %1337 = vmatprep.subr.mxu0 0.0
  %1338 = vmatpush2.msra.mxu0 0.0
  %1339 = vmatprep.mubr.f32.mxu0 0.0
  %1340 = vmatmul.mubr.f32.gmra.mxu0 %v1273
  %v1341 = vpop.f32.mrf.mxu0
  %v1342 = vadd.f32 %v1269, %v1341
  %v1343 = vpop.f32.mrf.mxu0
  %1344 = vdwg.mxu0
  %v1345 = vxor.u32 %v1342, 2147483648
  %v1346 = vmul.f32 %v1345, 1.442695
  %v1347 = vpow.pop %v1346
  %v1348 = vadd.f32 %v1347, 1.0
  %v1349 = vrcp.pop %v1348
  %v1350 = vmul.f32 1.0, %v1349
  %vm1351 = vcmask 23552
  %1352 = vst.msk [vmem:[%s9] sm:$0xff] %vm1351, %v1350
  // Predicated region
  $region38: #{forward.1} parent=0 // pred_check
    _
  $region39: #{forward.1} parent=0 // pred_check_branch
    %1354 = sbr.rel (0) target = $region41
  $region40: #{forward.1} parent=0 // pred_region
    _
  $region41: #{forward.1} parent=0 // pred_fallthru
    _
  // Predicated region
  $region42: #{forward.1} parent=0 // pred_check
    _
  $region43: #{forward.1} parent=0 // pred_check_branch
    %1356 = sbr.rel (0) target = $region45
  $region44: #{forward.1} parent=0 // pred_region
    _
  $region45: #{forward.1} parent=0 // pred_fallthru
    _

</llo_original>
